<compile_context>
chip_gen: v7x
topology: tpu7x:2x2x1
jax: 0.10.0
libtpu: 0.0.40
codegen_flags: <defaults>
</compile_context>

<pallas_src>
import jax
import jax.numpy as jnp
from jax import lax
from jax.experimental import pallas as pl
from jax.experimental.pallas import tpu as pltpu

INPUT_DIM = 4
HIDDEN_DIM = 32
NUM_LAYERS = 2
OUTPUT_DIM = 1


def lstm_kernel(xproj_ref,               # (T, Bb, 4H) = x @ W_ih0 + b0, precomputed
                whh0_ref,                # (H, 4H)   layer-0 recurrent weights
                w1ih_ref, w1hh_ref, b1_ref,   # layer-1: (H,4H), (H,4H), (1,4H)
                wfold_ref, bfold_ref,    # folded fc2∘fc: (H, 1), (1, 1)
                out_ref):                # (Bb, 1)
    H = HIDDEN_DIM
    T, Bb, _ = xproj_ref.shape

    # Hoist all loop-invariant loads / broadcasts out of the serial time loop.
    whh0 = whh0_ref[...]
    w1ih = w1ih_ref[...]
    w1hh = w1hh_ref[...]
    b1 = jnp.broadcast_to(b1_ref[...], (Bb, 4 * H))

    def gates_to_hc(gates, c):
        # One full-vreg sigmoid + one full-vreg tanh over the 128-lane gate
        # slab (EUP), then 32-lane extracts.  PyTorch gate order: i, f, g, o.
        sg = jax.nn.sigmoid(gates)
        tg = jnp.tanh(gates)
        i = sg[:, 0 * H:1 * H]
        f = sg[:, 1 * H:2 * H]
        g = tg[:, 2 * H:3 * H]
        o = sg[:, 3 * H:4 * H]
        c_new = f * c + i * g
        h_new = o * jnp.tanh(c_new)
        return h_new, c_new

    def step(t, carry):
        h0, c0, h1, c1 = carry
        # Layer 0: input projection (incl. b0) already done time-parallel;
        # only the h-dependent matmul sits on the recurrence.
        g0 = xproj_ref[t] + jnp.dot(h0, whh0, preferred_element_type=jnp.float32)
        h0, c0 = gates_to_hc(g0, c0)
        # Layer 1: split weights, two accumulated matmuls (no per-step concat).
        g1 = (jnp.dot(h0, w1ih, preferred_element_type=jnp.float32)
              + jnp.dot(h1, w1hh, preferred_element_type=jnp.float32)
              + b1)
        h1, c1 = gates_to_hc(g1, c1)
        return (h0, c0, h1, c1)

    zeros = jnp.zeros((Bb, H), jnp.float32)
    # Full unroll only for short sequences; cap otherwise so the ~12 resident
    # weight vregs + wavefronted cells don't spill onto the serial path.
    unroll = True if T <= 16 else 8
    _, _, h1, _ = lax.fori_loop(0, T, step, (zeros, zeros, zeros, zeros),
                                unroll=unroll)

    # out[:, -1, :] of layer-2 == h1 after the last step; fc2 and fc are folded
    # into a single linear (exact: no nonlinearity between them).
    y = jnp.dot(h1, wfold_ref[...], preferred_element_type=jnp.float32) + bfold_ref[...]
    out_ref[...] = y.astype(out_ref.dtype)


def _batch_block(B):
    """Batch tile: multiple of 8, capped at 256, and producing >=2 tiles when
    B >= 16 so dimension_semantics=('parallel',) can use both v7x TensorCores.
    Falls back to a single full-batch block for small / non-multiple-of-8 B."""
    if B % 8 != 0:
        return B
    bb = min(256, max(8, (B // 2) // 8 * 8))
    while B % bb != 0:
        bb -= 8
    return bb


def baseline_lstm_forward(x, params):
    """x: (B, T, D) float32, batch-first (PyTorch convention)."""
    B, T, D = x.shape
    assert D == INPUT_DIM
    H = HIDDEN_DIM

    # (1) Time-parallel layer-0 input projection (with b0 folded in), hoisted
    #     off the serial recurrence.  Lane-dense (T, B, 4H) kernel operand.
    #     For long T / large batch tiles, chunk the time axis so the
    #     double-buffered xproj tile stays under the v7x 64 MiB VMEM budget;
    #     at these shapes it is a few KiB.
    xproj = (jnp.einsum("btd,dg->tbg", x, params["wih0"])
             + params["b0"]).astype(jnp.float32)

    # (5) Fold fc2 ∘ fc into one linear (exact — no activation between them).
    wfold = params["wfc2"] @ params["wfc"]                       # (H, 1)
    bfold = params["bfc2"] @ params["wfc"] + params["bfc"]       # (1, 1)

    bb = _batch_block(B)
    nb = B // bb

    operands = (
        xproj,
        params["whh0"],
        params["wih1"], params["whh1"], params["b1"],
        wfold, bfold,
    )

    def full(shape):
        n = len(shape)
        return pl.BlockSpec(shape, lambda i, _n=n: (0,) * _n)

    in_specs = [
        pl.BlockSpec((T, bb, 4 * H), lambda i: (0, i, 0)),       # xproj: batch-tiled
        full(params["whh0"].shape),
        full(params["wih1"].shape),
        full(params["whh1"].shape),
        full(params["b1"].shape),
        full(wfold.shape),
        full(bfold.shape),
    ]
    out_specs = pl.BlockSpec((bb, OUTPUT_DIM), lambda i: (i, 0))

    return pl.pallas_call(
        lstm_kernel,
        out_shape=jax.ShapeDtypeStruct((B, OUTPUT_DIM), jnp.float32),
        grid=(nb,),
        in_specs=in_specs,
        out_specs=out_specs,
        compiler_params=pltpu.CompilerParams(
            dimension_semantics=("parallel",)),
    )(*operands)


def init_params(key):
    """Deterministic init; same shapes as the PyTorch module (weights stored
    pre-transposed as (in, out); b = b_ih + b_hh folded together)."""
    H, D = HIDDEN_DIM, INPUT_DIM
    k = 1.0 / jnp.sqrt(jnp.float32(H))
    keys = jax.random.split(key, 10)

    def u(kk, shape):
        return jax.random.uniform(kk, shape, jnp.float32, -k, k)

    return {
        "wih0": u(keys[0], (D, 4 * H)),
        "whh0": u(keys[1], (H, 4 * H)),
        "b0":   u(keys[2], (1, 4 * H)),
        "wih1": u(keys[3], (H, 4 * H)),
        "whh1": u(keys[4], (H, 4 * H)),
        "b1":   u(keys[5], (1, 4 * H)),
        "wfc2": u(keys[6], (H, H)),
        "bfc2": u(keys[7], (1, H)),
        "wfc":  u(keys[8], (H, OUTPUT_DIM)),
        "bfc":  u(keys[9], (1, OUTPUT_DIM)),
    }


def reference_forward(x, params):
    """Pure-JAX reference implementing the PyTorch forward (eval mode)."""
    B, T, D = x.shape
    H = HIDDEN_DIM

    def cell(x_t, h, c, wih, whh, b):
        gates = x_t @ wih + h @ whh + b
        i = jax.nn.sigmoid(gates[:, 0 * H:1 * H])
        f = jax.nn.sigmoid(gates[:, 1 * H:2 * H])
        g = jnp.tanh(gates[:, 2 * H:3 * H])
        o = jax.nn.sigmoid(gates[:, 3 * H:4 * H])
        c = f * c + i * g
        h = o * jnp.tanh(c)
        return h, c

    h0 = c0 = h1 = c1 = jnp.zeros((B, H), jnp.float32)
    for t in range(T):
        h0, c0 = cell(x[:, t, :], h0, c0,
                      params["wih0"], params["whh0"], params["b0"])
        h1, c1 = cell(h0, h1, c1,
                      params["wih1"], params["whh1"], params["b1"])
    y = h1 @ params["wfc2"] + params["bfc2"]
    y = y @ params["wfc"] + params["bfc"]
    return y


if __name__ == "__main__":
    key = jax.random.PRNGKey(0)
    k_x, k_p = jax.random.split(key)

    B, T = 2, 8
    x = jax.random.normal(k_x, (B, T, INPUT_DIM), jnp.float32)
    params = init_params(k_p)

    out = baseline_lstm_forward(x, params)
    out = jax.block_until_ready(out)

    ref = reference_forward(x, params)
    assert out.shape == (B, OUTPUT_DIM)
    assert jnp.allclose(out, ref, atol=1e-5, rtol=1e-5), (out, ref)

    print("KERNEL_OK")
</pallas_src>

<mosaic_0001>
module attributes {stable_mosaic.version = 11 : i64} {
  func.func @lstm_kernel(%arg0: i32, %arg1: memref<8x2x128xf32, #tpu.memory_space<vmem>>, %arg2: memref<32x128xf32, #tpu.memory_space<vmem>>, %arg3: memref<32x128xf32, #tpu.memory_space<vmem>>, %arg4: memref<32x128xf32, #tpu.memory_space<vmem>>, %arg5: memref<1x128xf32, #tpu.memory_space<vmem>>, %arg6: memref<32x1xf32, #tpu.memory_space<vmem>>, %arg7: memref<1x1xf32, #tpu.memory_space<vmem>>, %arg8: memref<2x1xf32, #tpu.memory_space<vmem>>) attributes {dimension_semantics = [#tpu.dimension_semantics<parallel>], iteration_bounds = array<i64: 1>, scalar_prefetch = 0 : i64, scratch_operands = 0 : i64, tpu.core_type = #tpu.core_type<tc>, window_params = [{transform_indices = @transform_0, window_bounds = array<i64: 8, 2, 128>}, {pipeline_mode = #tpu.pipeline_mode<synchronous>, transform_indices = @transform_1, window_bounds = array<i64: 32, 128>}, {pipeline_mode = #tpu.pipeline_mode<synchronous>, transform_indices = @transform_2, window_bounds = array<i64: 32, 128>}, {pipeline_mode = #tpu.pipeline_mode<synchronous>, transform_indices = @transform_3, window_bounds = array<i64: 32, 128>}, {pipeline_mode = #tpu.pipeline_mode<synchronous>, transform_indices = @transform_4, window_bounds = array<i64: 1, 128>}, {pipeline_mode = #tpu.pipeline_mode<synchronous>, transform_indices = @transform_5, window_bounds = array<i64: 32, 1>}, {pipeline_mode = #tpu.pipeline_mode<synchronous>, transform_indices = @transform_6, window_bounds = array<i64: 1, 1>}, {transform_indices = @transform_7, window_bounds = array<i64: 2, 1>}]} {
    %c0 = arith.constant 0 : index
    %c0_0 = arith.constant 0 : index
    %0 = vector.load %arg2[%c0, %c0_0] : memref<32x128xf32, #tpu.memory_space<vmem>>, vector<32x128xf32>
    %c0_1 = arith.constant 0 : index
    %c0_2 = arith.constant 0 : index
    %1 = vector.load %arg3[%c0_1, %c0_2] : memref<32x128xf32, #tpu.memory_space<vmem>>, vector<32x128xf32>
    %c0_3 = arith.constant 0 : index
    %c0_4 = arith.constant 0 : index
    %2 = vector.load %arg4[%c0_3, %c0_4] : memref<32x128xf32, #tpu.memory_space<vmem>>, vector<32x128xf32>
    %c0_5 = arith.constant 0 : index
    %c0_6 = arith.constant 0 : index
    %3 = vector.load %arg5[%c0_5, %c0_6] : memref<1x128xf32, #tpu.memory_space<vmem>>, vector<1x128xf32>
    %4 = vector.shape_cast %3 : vector<1x128xf32> to vector<1x128xf32>
    %5 = vector.broadcast %4 : vector<1x128xf32> to vector<2x128xf32>
    %cst = arith.constant 0.000000e+00 : f32
    %6 = vector.broadcast %cst : f32 to vector<2x32xf32>
    %c0_i32 = arith.constant 0 : i32
    %7 = arith.index_cast %c0_i32 : i32 to index
    %c0_7 = arith.constant 0 : index
    %c0_8 = arith.constant 0 : index
    %8 = vector.load %arg1[%7, %c0_7, %c0_8] : memref<8x2x128xf32, #tpu.memory_space<vmem>>, vector<1x2x128xf32>
    %9 = vector.shape_cast %8 : vector<1x2x128xf32> to vector<2x128xf32>
    %cst_9 = arith.constant dense<0.000000e+00> : vector<2x128xf32>
    %10 = tpu.matmul %6, %0, %cst_9 {dimension_numbers = #tpu.dot_dimension_numbers<[1], [0], [0], [1], [0, 0, 1, 1], [], []>} : vector<2x32xf32>, vector<32x128xf32>, vector<2x128xf32> -> vector<2x128xf32>
    %11 = arith.addf %9, %10 : vector<2x128xf32>
    %12 = arith.negf %11 : vector<2x128xf32>
    %13 = math.exp %12 : vector<2x128xf32>
    %cst_10 = arith.constant 1.000000e+00 : f32
    %14 = vector.broadcast %cst_10 : f32 to vector<2x128xf32>
    %15 = arith.addf %14, %13 : vector<2x128xf32>
    %16 = arith.divf %14, %15 : vector<2x128xf32>
    %17 = math.tanh %11 : vector<2x128xf32>
    %18 = vector.extract_strided_slice %16 {offsets = [0, 0], sizes = [2, 32], strides = [1, 1]} : vector<2x128xf32> to vector<2x32xf32>
    %19 = vector.extract_strided_slice %16 {offsets = [0, 32], sizes = [2, 32], strides = [1, 1]} : vector<2x128xf32> to vector<2x32xf32>
    %20 = vector.extract_strided_slice %17 {offsets = [0, 64], sizes = [2, 32], strides = [1, 1]} : vector<2x128xf32> to vector<2x32xf32>
    %21 = vector.extract_strided_slice %16 {offsets = [0, 96], sizes = [2, 32], strides = [1, 1]} : vector<2x128xf32> to vector<2x32xf32>
    %22 = arith.mulf %19, %6 : vector<2x32xf32>
    %23 = arith.mulf %18, %20 : vector<2x32xf32>
    %24 = arith.addf %22, %23 : vector<2x32xf32>
    %25 = math.tanh %24 : vector<2x32xf32>
    %26 = arith.mulf %21, %25 : vector<2x32xf32>
    %cst_11 = arith.constant dense<0.000000e+00> : vector<2x128xf32>
    %27 = tpu.matmul %26, %1, %cst_11 {dimension_numbers = #tpu.dot_dimension_numbers<[1], [0], [0], [1], [0, 0, 1, 1], [], []>} : vector<2x32xf32>, vector<32x128xf32>, vector<2x128xf32> -> vector<2x128xf32>
    %cst_12 = arith.constant dense<0.000000e+00> : vector<2x128xf32>
    %28 = tpu.matmul %6, %2, %cst_12 {dimension_numbers = #tpu.dot_dimension_numbers<[1], [0], [0], [1], [0, 0, 1, 1], [], []>} : vector<2x32xf32>, vector<32x128xf32>, vector<2x128xf32> -> vector<2x128xf32>
    %29 = arith.addf %27, %28 : vector<2x128xf32>
    %30 = arith.addf %29, %5 : vector<2x128xf32>
    %31 = arith.negf %30 : vector<2x128xf32>
    %32 = math.exp %31 : vector<2x128xf32>
    %cst_13 = arith.constant 1.000000e+00 : f32
    %33 = vector.broadcast %cst_13 : f32 to vector<2x128xf32>
    %34 = arith.addf %33, %32 : vector<2x128xf32>
    %35 = arith.divf %33, %34 : vector<2x128xf32>
    %36 = math.tanh %30 : vector<2x128xf32>
    %37 = vector.extract_strided_slice %35 {offsets = [0, 0], sizes = [2, 32], strides = [1, 1]} : vector<2x128xf32> to vector<2x32xf32>
    %38 = vector.extract_strided_slice %35 {offsets = [0, 32], sizes = [2, 32], strides = [1, 1]} : vector<2x128xf32> to vector<2x32xf32>
    %39 = vector.extract_strided_slice %36 {offsets = [0, 64], sizes = [2, 32], strides = [1, 1]} : vector<2x128xf32> to vector<2x32xf32>
    %40 = vector.extract_strided_slice %35 {offsets = [0, 96], sizes = [2, 32], strides = [1, 1]} : vector<2x128xf32> to vector<2x32xf32>
    %41 = arith.mulf %38, %6 : vector<2x32xf32>
    %42 = arith.mulf %37, %39 : vector<2x32xf32>
    %43 = arith.addf %41, %42 : vector<2x32xf32>
    %44 = math.tanh %43 : vector<2x32xf32>
    %45 = arith.mulf %40, %44 : vector<2x32xf32>
    %c1_i32 = arith.constant 1 : i32
    %46 = arith.index_cast %c1_i32 : i32 to index
    %c0_14 = arith.constant 0 : index
    %c0_15 = arith.constant 0 : index
    %47 = vector.load %arg1[%46, %c0_14, %c0_15] : memref<8x2x128xf32, #tpu.memory_space<vmem>>, vector<1x2x128xf32>
    %48 = vector.shape_cast %47 : vector<1x2x128xf32> to vector<2x128xf32>
    %cst_16 = arith.constant dense<0.000000e+00> : vector<2x128xf32>
    %49 = tpu.matmul %26, %0, %cst_16 {dimension_numbers = #tpu.dot_dimension_numbers<[1], [0], [0], [1], [0, 0, 1, 1], [], []>} : vector<2x32xf32>, vector<32x128xf32>, vector<2x128xf32> -> vector<2x128xf32>
    %50 = arith.addf %48, %49 : vector<2x128xf32>
    %51 = arith.negf %50 : vector<2x128xf32>
    %52 = math.exp %51 : vector<2x128xf32>
    %cst_17 = arith.constant 1.000000e+00 : f32
    %53 = vector.broadcast %cst_17 : f32 to vector<2x128xf32>
    %54 = arith.addf %53, %52 : vector<2x128xf32>
    %55 = arith.divf %53, %54 : vector<2x128xf32>
    %56 = math.tanh %50 : vector<2x128xf32>
    %57 = vector.extract_strided_slice %55 {offsets = [0, 0], sizes = [2, 32], strides = [1, 1]} : vector<2x128xf32> to vector<2x32xf32>
    %58 = vector.extract_strided_slice %55 {offsets = [0, 32], sizes = [2, 32], strides = [1, 1]} : vector<2x128xf32> to vector<2x32xf32>
    %59 = vector.extract_strided_slice %56 {offsets = [0, 64], sizes = [2, 32], strides = [1, 1]} : vector<2x128xf32> to vector<2x32xf32>
    %60 = vector.extract_strided_slice %55 {offsets = [0, 96], sizes = [2, 32], strides = [1, 1]} : vector<2x128xf32> to vector<2x32xf32>
    %61 = arith.mulf %58, %24 : vector<2x32xf32>
    %62 = arith.mulf %57, %59 : vector<2x32xf32>
    %63 = arith.addf %61, %62 : vector<2x32xf32>
    %64 = math.tanh %63 : vector<2x32xf32>
    %65 = arith.mulf %60, %64 : vector<2x32xf32>
    %cst_18 = arith.constant dense<0.000000e+00> : vector<2x128xf32>
    %66 = tpu.matmul %65, %1, %cst_18 {dimension_numbers = #tpu.dot_dimension_numbers<[1], [0], [0], [1], [0, 0, 1, 1], [], []>} : vector<2x32xf32>, vector<32x128xf32>, vector<2x128xf32> -> vector<2x128xf32>
    %cst_19 = arith.constant dense<0.000000e+00> : vector<2x128xf32>
    %67 = tpu.matmul %45, %2, %cst_19 {dimension_numbers = #tpu.dot_dimension_numbers<[1], [0], [0], [1], [0, 0, 1, 1], [], []>} : vector<2x32xf32>, vector<32x128xf32>, vector<2x128xf32> -> vector<2x128xf32>
    %68 = arith.addf %66, %67 : vector<2x128xf32>
    %69 = arith.addf %68, %5 : vector<2x128xf32>
    %70 = arith.negf %69 : vector<2x128xf32>
    %71 = math.exp %70 : vector<2x128xf32>
    %cst_20 = arith.constant 1.000000e+00 : f32
    %72 = vector.broadcast %cst_20 : f32 to vector<2x128xf32>
    %73 = arith.addf %72, %71 : vector<2x128xf32>
    %74 = arith.divf %72, %73 : vector<2x128xf32>
    %75 = math.tanh %69 : vector<2x128xf32>
    %76 = vector.extract_strided_slice %74 {offsets = [0, 0], sizes = [2, 32], strides = [1, 1]} : vector<2x128xf32> to vector<2x32xf32>
    %77 = vector.extract_strided_slice %74 {offsets = [0, 32], sizes = [2, 32], strides = [1, 1]} : vector<2x128xf32> to vector<2x32xf32>
    %78 = vector.extract_strided_slice %75 {offsets = [0, 64], sizes = [2, 32], strides = [1, 1]} : vector<2x128xf32> to vector<2x32xf32>
    %79 = vector.extract_strided_slice %74 {offsets = [0, 96], sizes = [2, 32], strides = [1, 1]} : vector<2x128xf32> to vector<2x32xf32>
    %80 = arith.mulf %77, %43 : vector<2x32xf32>
    %81 = arith.mulf %76, %78 : vector<2x32xf32>
    %82 = arith.addf %80, %81 : vector<2x32xf32>
    %83 = math.tanh %82 : vector<2x32xf32>
    %84 = arith.mulf %79, %83 : vector<2x32xf32>
    %c2_i32 = arith.constant 2 : i32
    %85 = arith.index_cast %c2_i32 : i32 to index
    %c0_21 = arith.constant 0 : index
    %c0_22 = arith.constant 0 : index
    %86 = vector.load %arg1[%85, %c0_21, %c0_22] : memref<8x2x128xf32, #tpu.memory_space<vmem>>, vector<1x2x128xf32>
    %87 = vector.shape_cast %86 : vector<1x2x128xf32> to vector<2x128xf32>
    %cst_23 = arith.constant dense<0.000000e+00> : vector<2x128xf32>
    %88 = tpu.matmul %65, %0, %cst_23 {dimension_numbers = #tpu.dot_dimension_numbers<[1], [0], [0], [1], [0, 0, 1, 1], [], []>} : vector<2x32xf32>, vector<32x128xf32>, vector<2x128xf32> -> vector<2x128xf32>
    %89 = arith.addf %87, %88 : vector<2x128xf32>
    %90 = arith.negf %89 : vector<2x128xf32>
    %91 = math.exp %90 : vector<2x128xf32>
    %cst_24 = arith.constant 1.000000e+00 : f32
    %92 = vector.broadcast %cst_24 : f32 to vector<2x128xf32>
    %93 = arith.addf %92, %91 : vector<2x128xf32>
    %94 = arith.divf %92, %93 : vector<2x128xf32>
    %95 = math.tanh %89 : vector<2x128xf32>
    %96 = vector.extract_strided_slice %94 {offsets = [0, 0], sizes = [2, 32], strides = [1, 1]} : vector<2x128xf32> to vector<2x32xf32>
    %97 = vector.extract_strided_slice %94 {offsets = [0, 32], sizes = [2, 32], strides = [1, 1]} : vector<2x128xf32> to vector<2x32xf32>
    %98 = vector.extract_strided_slice %95 {offsets = [0, 64], sizes = [2, 32], strides = [1, 1]} : vector<2x128xf32> to vector<2x32xf32>
    %99 = vector.extract_strided_slice %94 {offsets = [0, 96], sizes = [2, 32], strides = [1, 1]} : vector<2x128xf32> to vector<2x32xf32>
    %100 = arith.mulf %97, %63 : vector<2x32xf32>
    %101 = arith.mulf %96, %98 : vector<2x32xf32>
    %102 = arith.addf %100, %101 : vector<2x32xf32>
    %103 = math.tanh %102 : vector<2x32xf32>
    %104 = arith.mulf %99, %103 : vector<2x32xf32>
    %cst_25 = arith.constant dense<0.000000e+00> : vector<2x128xf32>
    %105 = tpu.matmul %104, %1, %cst_25 {dimension_numbers = #tpu.dot_dimension_numbers<[1], [0], [0], [1], [0, 0, 1, 1], [], []>} : vector<2x32xf32>, vector<32x128xf32>, vector<2x128xf32> -> vector<2x128xf32>
    %cst_26 = arith.constant dense<0.000000e+00> : vector<2x128xf32>
    %106 = tpu.matmul %84, %2, %cst_26 {dimension_numbers = #tpu.dot_dimension_numbers<[1], [0], [0], [1], [0, 0, 1, 1], [], []>} : vector<2x32xf32>, vector<32x128xf32>, vector<2x128xf32> -> vector<2x128xf32>
    %107 = arith.addf %105, %106 : vector<2x128xf32>
    %108 = arith.addf %107, %5 : vector<2x128xf32>
    %109 = arith.negf %108 : vector<2x128xf32>
    %110 = math.exp %109 : vector<2x128xf32>
    %cst_27 = arith.constant 1.000000e+00 : f32
    %111 = vector.broadcast %cst_27 : f32 to vector<2x128xf32>
    %112 = arith.addf %111, %110 : vector<2x128xf32>
    %113 = arith.divf %111, %112 : vector<2x128xf32>
    %114 = math.tanh %108 : vector<2x128xf32>
    %115 = vector.extract_strided_slice %113 {offsets = [0, 0], sizes = [2, 32], strides = [1, 1]} : vector<2x128xf32> to vector<2x32xf32>
    %116 = vector.extract_strided_slice %113 {offsets = [0, 32], sizes = [2, 32], strides = [1, 1]} : vector<2x128xf32> to vector<2x32xf32>
    %117 = vector.extract_strided_slice %114 {offsets = [0, 64], sizes = [2, 32], strides = [1, 1]} : vector<2x128xf32> to vector<2x32xf32>
    %118 = vector.extract_strided_slice %113 {offsets = [0, 96], sizes = [2, 32], strides = [1, 1]} : vector<2x128xf32> to vector<2x32xf32>
    %119 = arith.mulf %116, %82 : vector<2x32xf32>
    %120 = arith.mulf %115, %117 : vector<2x32xf32>
    %121 = arith.addf %119, %120 : vector<2x32xf32>
    %122 = math.tanh %121 : vector<2x32xf32>
    %123 = arith.mulf %118, %122 : vector<2x32xf32>
    %c3_i32 = arith.constant 3 : i32
    %124 = arith.index_cast %c3_i32 : i32 to index
    %c0_28 = arith.constant 0 : index
    %c0_29 = arith.constant 0 : index
    %125 = vector.load %arg1[%124, %c0_28, %c0_29] : memref<8x2x128xf32, #tpu.memory_space<vmem>>, vector<1x2x128xf32>
    %126 = vector.shape_cast %125 : vector<1x2x128xf32> to vector<2x128xf32>
    %cst_30 = arith.constant dense<0.000000e+00> : vector<2x128xf32>
    %127 = tpu.matmul %104, %0, %cst_30 {dimension_numbers = #tpu.dot_dimension_numbers<[1], [0], [0], [1], [0, 0, 1, 1], [], []>} : vector<2x32xf32>, vector<32x128xf32>, vector<2x128xf32> -> vector<2x128xf32>
    %128 = arith.addf %126, %127 : vector<2x128xf32>
    %129 = arith.negf %128 : vector<2x128xf32>
    %130 = math.exp %129 : vector<2x128xf32>
    %cst_31 = arith.constant 1.000000e+00 : f32
    %131 = vector.broadcast %cst_31 : f32 to vector<2x128xf32>
    %132 = arith.addf %131, %130 : vector<2x128xf32>
    %133 = arith.divf %131, %132 : vector<2x128xf32>
    %134 = math.tanh %128 : vector<2x128xf32>
    %135 = vector.extract_strided_slice %133 {offsets = [0, 0], sizes = [2, 32], strides = [1, 1]} : vector<2x128xf32> to vector<2x32xf32>
    %136 = vector.extract_strided_slice %133 {offsets = [0, 32], sizes = [2, 32], strides = [1, 1]} : vector<2x128xf32> to vector<2x32xf32>
    %137 = vector.extract_strided_slice %134 {offsets = [0, 64], sizes = [2, 32], strides = [1, 1]} : vector<2x128xf32> to vector<2x32xf32>
    %138 = vector.extract_strided_slice %133 {offsets = [0, 96], sizes = [2, 32], strides = [1, 1]} : vector<2x128xf32> to vector<2x32xf32>
    %139 = arith.mulf %136, %102 : vector<2x32xf32>
    %140 = arith.mulf %135, %137 : vector<2x32xf32>
    %141 = arith.addf %139, %140 : vector<2x32xf32>
    %142 = math.tanh %141 : vector<2x32xf32>
    %143 = arith.mulf %138, %142 : vector<2x32xf32>
    %cst_32 = arith.constant dense<0.000000e+00> : vector<2x128xf32>
    %144 = tpu.matmul %143, %1, %cst_32 {dimension_numbers = #tpu.dot_dimension_numbers<[1], [0], [0], [1], [0, 0, 1, 1], [], []>} : vector<2x32xf32>, vector<32x128xf32>, vector<2x128xf32> -> vector<2x128xf32>
    %cst_33 = arith.constant dense<0.000000e+00> : vector<2x128xf32>
    %145 = tpu.matmul %123, %2, %cst_33 {dimension_numbers = #tpu.dot_dimension_numbers<[1], [0], [0], [1], [0, 0, 1, 1], [], []>} : vector<2x32xf32>, vector<32x128xf32>, vector<2x128xf32> -> vector<2x128xf32>
    %146 = arith.addf %144, %145 : vector<2x128xf32>
    %147 = arith.addf %146, %5 : vector<2x128xf32>
    %148 = arith.negf %147 : vector<2x128xf32>
    %149 = math.exp %148 : vector<2x128xf32>
    %cst_34 = arith.constant 1.000000e+00 : f32
    %150 = vector.broadcast %cst_34 : f32 to vector<2x128xf32>
    %151 = arith.addf %150, %149 : vector<2x128xf32>
    %152 = arith.divf %150, %151 : vector<2x128xf32>
    %153 = math.tanh %147 : vector<2x128xf32>
    %154 = vector.extract_strided_slice %152 {offsets = [0, 0], sizes = [2, 32], strides = [1, 1]} : vector<2x128xf32> to vector<2x32xf32>
    %155 = vector.extract_strided_slice %152 {offsets = [0, 32], sizes = [2, 32], strides = [1, 1]} : vector<2x128xf32> to vector<2x32xf32>
    %156 = vector.extract_strided_slice %153 {offsets = [0, 64], sizes = [2, 32], strides = [1, 1]} : vector<2x128xf32> to vector<2x32xf32>
    %157 = vector.extract_strided_slice %152 {offsets = [0, 96], sizes = [2, 32], strides = [1, 1]} : vector<2x128xf32> to vector<2x32xf32>
    %158 = arith.mulf %155, %121 : vector<2x32xf32>
    %159 = arith.mulf %154, %156 : vector<2x32xf32>
    %160 = arith.addf %158, %159 : vector<2x32xf32>
    %161 = math.tanh %160 : vector<2x32xf32>
    %162 = arith.mulf %157, %161 : vector<2x32xf32>
    %c4_i32 = arith.constant 4 : i32
    %163 = arith.index_cast %c4_i32 : i32 to index
    %c0_35 = arith.constant 0 : index
    %c0_36 = arith.constant 0 : index
    %164 = vector.load %arg1[%163, %c0_35, %c0_36] : memref<8x2x128xf32, #tpu.memory_space<vmem>>, vector<1x2x128xf32>
    %165 = vector.shape_cast %164 : vector<1x2x128xf32> to vector<2x128xf32>
    %cst_37 = arith.constant dense<0.000000e+00> : vector<2x128xf32>
    %166 = tpu.matmul %143, %0, %cst_37 {dimension_numbers = #tpu.dot_dimension_numbers<[1], [0], [0], [1], [0, 0, 1, 1], [], []>} : vector<2x32xf32>, vector<32x128xf32>, vector<2x128xf32> -> vector<2x128xf32>
    %167 = arith.addf %165, %166 : vector<2x128xf32>
    %168 = arith.negf %167 : vector<2x128xf32>
    %169 = math.exp %168 : vector<2x128xf32>
    %cst_38 = arith.constant 1.000000e+00 : f32
    %170 = vector.broadcast %cst_38 : f32 to vector<2x128xf32>
    %171 = arith.addf %170, %169 : vector<2x128xf32>
    %172 = arith.divf %170, %171 : vector<2x128xf32>
    %173 = math.tanh %167 : vector<2x128xf32>
    %174 = vector.extract_strided_slice %172 {offsets = [0, 0], sizes = [2, 32], strides = [1, 1]} : vector<2x128xf32> to vector<2x32xf32>
    %175 = vector.extract_strided_slice %172 {offsets = [0, 32], sizes = [2, 32], strides = [1, 1]} : vector<2x128xf32> to vector<2x32xf32>
    %176 = vector.extract_strided_slice %173 {offsets = [0, 64], sizes = [2, 32], strides = [1, 1]} : vector<2x128xf32> to vector<2x32xf32>
    %177 = vector.extract_strided_slice %172 {offsets = [0, 96], sizes = [2, 32], strides = [1, 1]} : vector<2x128xf32> to vector<2x32xf32>
    %178 = arith.mulf %175, %141 : vector<2x32xf32>
    %179 = arith.mulf %174, %176 : vector<2x32xf32>
    %180 = arith.addf %178, %179 : vector<2x32xf32>
    %181 = math.tanh %180 : vector<2x32xf32>
    %182 = arith.mulf %177, %181 : vector<2x32xf32>
    %cst_39 = arith.constant dense<0.000000e+00> : vector<2x128xf32>
    %183 = tpu.matmul %182, %1, %cst_39 {dimension_numbers = #tpu.dot_dimension_numbers<[1], [0], [0], [1], [0, 0, 1, 1], [], []>} : vector<2x32xf32>, vector<32x128xf32>, vector<2x128xf32> -> vector<2x128xf32>
    %cst_40 = arith.constant dense<0.000000e+00> : vector<2x128xf32>
    %184 = tpu.matmul %162, %2, %cst_40 {dimension_numbers = #tpu.dot_dimension_numbers<[1], [0], [0], [1], [0, 0, 1, 1], [], []>} : vector<2x32xf32>, vector<32x128xf32>, vector<2x128xf32> -> vector<2x128xf32>
    %185 = arith.addf %183, %184 : vector<2x128xf32>
    %186 = arith.addf %185, %5 : vector<2x128xf32>
    %187 = arith.negf %186 : vector<2x128xf32>
    %188 = math.exp %187 : vector<2x128xf32>
    %cst_41 = arith.constant 1.000000e+00 : f32
    %189 = vector.broadcast %cst_41 : f32 to vector<2x128xf32>
    %190 = arith.addf %189, %188 : vector<2x128xf32>
    %191 = arith.divf %189, %190 : vector<2x128xf32>
    %192 = math.tanh %186 : vector<2x128xf32>
    %193 = vector.extract_strided_slice %191 {offsets = [0, 0], sizes = [2, 32], strides = [1, 1]} : vector<2x128xf32> to vector<2x32xf32>
    %194 = vector.extract_strided_slice %191 {offsets = [0, 32], sizes = [2, 32], strides = [1, 1]} : vector<2x128xf32> to vector<2x32xf32>
    %195 = vector.extract_strided_slice %192 {offsets = [0, 64], sizes = [2, 32], strides = [1, 1]} : vector<2x128xf32> to vector<2x32xf32>
    %196 = vector.extract_strided_slice %191 {offsets = [0, 96], sizes = [2, 32], strides = [1, 1]} : vector<2x128xf32> to vector<2x32xf32>
    %197 = arith.mulf %194, %160 : vector<2x32xf32>
    %198 = arith.mulf %193, %195 : vector<2x32xf32>
    %199 = arith.addf %197, %198 : vector<2x32xf32>
    %200 = math.tanh %199 : vector<2x32xf32>
    %201 = arith.mulf %196, %200 : vector<2x32xf32>
    %c5_i32 = arith.constant 5 : i32
    %202 = arith.index_cast %c5_i32 : i32 to index
    %c0_42 = arith.constant 0 : index
    %c0_43 = arith.constant 0 : index
    %203 = vector.load %arg1[%202, %c0_42, %c0_43] : memref<8x2x128xf32, #tpu.memory_space<vmem>>, vector<1x2x128xf32>
    %204 = vector.shape_cast %203 : vector<1x2x128xf32> to vector<2x128xf32>
    %cst_44 = arith.constant dense<0.000000e+00> : vector<2x128xf32>
    %205 = tpu.matmul %182, %0, %cst_44 {dimension_numbers = #tpu.dot_dimension_numbers<[1], [0], [0], [1], [0, 0, 1, 1], [], []>} : vector<2x32xf32>, vector<32x128xf32>, vector<2x128xf32> -> vector<2x128xf32>
    %206 = arith.addf %204, %205 : vector<2x128xf32>
    %207 = arith.negf %206 : vector<2x128xf32>
    %208 = math.exp %207 : vector<2x128xf32>
    %cst_45 = arith.constant 1.000000e+00 : f32
    %209 = vector.broadcast %cst_45 : f32 to vector<2x128xf32>
    %210 = arith.addf %209, %208 : vector<2x128xf32>
    %211 = arith.divf %209, %210 : vector<2x128xf32>
    %212 = math.tanh %206 : vector<2x128xf32>
    %213 = vector.extract_strided_slice %211 {offsets = [0, 0], sizes = [2, 32], strides = [1, 1]} : vector<2x128xf32> to vector<2x32xf32>
    %214 = vector.extract_strided_slice %211 {offsets = [0, 32], sizes = [2, 32], strides = [1, 1]} : vector<2x128xf32> to vector<2x32xf32>
    %215 = vector.extract_strided_slice %212 {offsets = [0, 64], sizes = [2, 32], strides = [1, 1]} : vector<2x128xf32> to vector<2x32xf32>
    %216 = vector.extract_strided_slice %211 {offsets = [0, 96], sizes = [2, 32], strides = [1, 1]} : vector<2x128xf32> to vector<2x32xf32>
    %217 = arith.mulf %214, %180 : vector<2x32xf32>
    %218 = arith.mulf %213, %215 : vector<2x32xf32>
    %219 = arith.addf %217, %218 : vector<2x32xf32>
    %220 = math.tanh %219 : vector<2x32xf32>
    %221 = arith.mulf %216, %220 : vector<2x32xf32>
    %cst_46 = arith.constant dense<0.000000e+00> : vector<2x128xf32>
    %222 = tpu.matmul %221, %1, %cst_46 {dimension_numbers = #tpu.dot_dimension_numbers<[1], [0], [0], [1], [0, 0, 1, 1], [], []>} : vector<2x32xf32>, vector<32x128xf32>, vector<2x128xf32> -> vector<2x128xf32>
    %cst_47 = arith.constant dense<0.000000e+00> : vector<2x128xf32>
    %223 = tpu.matmul %201, %2, %cst_47 {dimension_numbers = #tpu.dot_dimension_numbers<[1], [0], [0], [1], [0, 0, 1, 1], [], []>} : vector<2x32xf32>, vector<32x128xf32>, vector<2x128xf32> -> vector<2x128xf32>
    %224 = arith.addf %222, %223 : vector<2x128xf32>
    %225 = arith.addf %224, %5 : vector<2x128xf32>
    %226 = arith.negf %225 : vector<2x128xf32>
    %227 = math.exp %226 : vector<2x128xf32>
    %cst_48 = arith.constant 1.000000e+00 : f32
    %228 = vector.broadcast %cst_48 : f32 to vector<2x128xf32>
    %229 = arith.addf %228, %227 : vector<2x128xf32>
    %230 = arith.divf %228, %229 : vector<2x128xf32>
    %231 = math.tanh %225 : vector<2x128xf32>
    %232 = vector.extract_strided_slice %230 {offsets = [0, 0], sizes = [2, 32], strides = [1, 1]} : vector<2x128xf32> to vector<2x32xf32>
    %233 = vector.extract_strided_slice %230 {offsets = [0, 32], sizes = [2, 32], strides = [1, 1]} : vector<2x128xf32> to vector<2x32xf32>
    %234 = vector.extract_strided_slice %231 {offsets = [0, 64], sizes = [2, 32], strides = [1, 1]} : vector<2x128xf32> to vector<2x32xf32>
    %235 = vector.extract_strided_slice %230 {offsets = [0, 96], sizes = [2, 32], strides = [1, 1]} : vector<2x128xf32> to vector<2x32xf32>
    %236 = arith.mulf %233, %199 : vector<2x32xf32>
    %237 = arith.mulf %232, %234 : vector<2x32xf32>
    %238 = arith.addf %236, %237 : vector<2x32xf32>
    %239 = math.tanh %238 : vector<2x32xf32>
    %240 = arith.mulf %235, %239 : vector<2x32xf32>
    %c6_i32 = arith.constant 6 : i32
    %241 = arith.index_cast %c6_i32 : i32 to index
    %c0_49 = arith.constant 0 : index
    %c0_50 = arith.constant 0 : index
    %242 = vector.load %arg1[%241, %c0_49, %c0_50] : memref<8x2x128xf32, #tpu.memory_space<vmem>>, vector<1x2x128xf32>
    %243 = vector.shape_cast %242 : vector<1x2x128xf32> to vector<2x128xf32>
    %cst_51 = arith.constant dense<0.000000e+00> : vector<2x128xf32>
    %244 = tpu.matmul %221, %0, %cst_51 {dimension_numbers = #tpu.dot_dimension_numbers<[1], [0], [0], [1], [0, 0, 1, 1], [], []>} : vector<2x32xf32>, vector<32x128xf32>, vector<2x128xf32> -> vector<2x128xf32>
    %245 = arith.addf %243, %244 : vector<2x128xf32>
    %246 = arith.negf %245 : vector<2x128xf32>
    %247 = math.exp %246 : vector<2x128xf32>
    %cst_52 = arith.constant 1.000000e+00 : f32
    %248 = vector.broadcast %cst_52 : f32 to vector<2x128xf32>
    %249 = arith.addf %248, %247 : vector<2x128xf32>
    %250 = arith.divf %248, %249 : vector<2x128xf32>
    %251 = math.tanh %245 : vector<2x128xf32>
    %252 = vector.extract_strided_slice %250 {offsets = [0, 0], sizes = [2, 32], strides = [1, 1]} : vector<2x128xf32> to vector<2x32xf32>
    %253 = vector.extract_strided_slice %250 {offsets = [0, 32], sizes = [2, 32], strides = [1, 1]} : vector<2x128xf32> to vector<2x32xf32>
    %254 = vector.extract_strided_slice %251 {offsets = [0, 64], sizes = [2, 32], strides = [1, 1]} : vector<2x128xf32> to vector<2x32xf32>
    %255 = vector.extract_strided_slice %250 {offsets = [0, 96], sizes = [2, 32], strides = [1, 1]} : vector<2x128xf32> to vector<2x32xf32>
    %256 = arith.mulf %253, %219 : vector<2x32xf32>
    %257 = arith.mulf %252, %254 : vector<2x32xf32>
    %258 = arith.addf %256, %257 : vector<2x32xf32>
    %259 = math.tanh %258 : vector<2x32xf32>
    %260 = arith.mulf %255, %259 : vector<2x32xf32>
    %cst_53 = arith.constant dense<0.000000e+00> : vector<2x128xf32>
    %261 = tpu.matmul %260, %1, %cst_53 {dimension_numbers = #tpu.dot_dimension_numbers<[1], [0], [0], [1], [0, 0, 1, 1], [], []>} : vector<2x32xf32>, vector<32x128xf32>, vector<2x128xf32> -> vector<2x128xf32>
    %cst_54 = arith.constant dense<0.000000e+00> : vector<2x128xf32>
    %262 = tpu.matmul %240, %2, %cst_54 {dimension_numbers = #tpu.dot_dimension_numbers<[1], [0], [0], [1], [0, 0, 1, 1], [], []>} : vector<2x32xf32>, vector<32x128xf32>, vector<2x128xf32> -> vector<2x128xf32>
    %263 = arith.addf %261, %262 : vector<2x128xf32>
    %264 = arith.addf %263, %5 : vector<2x128xf32>
    %265 = arith.negf %264 : vector<2x128xf32>
    %266 = math.exp %265 : vector<2x128xf32>
    %cst_55 = arith.constant 1.000000e+00 : f32
    %267 = vector.broadcast %cst_55 : f32 to vector<2x128xf32>
    %268 = arith.addf %267, %266 : vector<2x128xf32>
    %269 = arith.divf %267, %268 : vector<2x128xf32>
    %270 = math.tanh %264 : vector<2x128xf32>
    %271 = vector.extract_strided_slice %269 {offsets = [0, 0], sizes = [2, 32], strides = [1, 1]} : vector<2x128xf32> to vector<2x32xf32>
    %272 = vector.extract_strided_slice %269 {offsets = [0, 32], sizes = [2, 32], strides = [1, 1]} : vector<2x128xf32> to vector<2x32xf32>
    %273 = vector.extract_strided_slice %270 {offsets = [0, 64], sizes = [2, 32], strides = [1, 1]} : vector<2x128xf32> to vector<2x32xf32>
    %274 = vector.extract_strided_slice %269 {offsets = [0, 96], sizes = [2, 32], strides = [1, 1]} : vector<2x128xf32> to vector<2x32xf32>
    %275 = arith.mulf %272, %238 : vector<2x32xf32>
    %276 = arith.mulf %271, %273 : vector<2x32xf32>
    %277 = arith.addf %275, %276 : vector<2x32xf32>
    %278 = math.tanh %277 : vector<2x32xf32>
    %279 = arith.mulf %274, %278 : vector<2x32xf32>
    %c7_i32 = arith.constant 7 : i32
    %280 = arith.index_cast %c7_i32 : i32 to index
    %c0_56 = arith.constant 0 : index
    %c0_57 = arith.constant 0 : index
    %281 = vector.load %arg1[%280, %c0_56, %c0_57] : memref<8x2x128xf32, #tpu.memory_space<vmem>>, vector<1x2x128xf32>
    %282 = vector.shape_cast %281 : vector<1x2x128xf32> to vector<2x128xf32>
    %cst_58 = arith.constant dense<0.000000e+00> : vector<2x128xf32>
    %283 = tpu.matmul %260, %0, %cst_58 {dimension_numbers = #tpu.dot_dimension_numbers<[1], [0], [0], [1], [0, 0, 1, 1], [], []>} : vector<2x32xf32>, vector<32x128xf32>, vector<2x128xf32> -> vector<2x128xf32>
    %284 = arith.addf %282, %283 : vector<2x128xf32>
    %285 = arith.negf %284 : vector<2x128xf32>
    %286 = math.exp %285 : vector<2x128xf32>
    %cst_59 = arith.constant 1.000000e+00 : f32
    %287 = vector.broadcast %cst_59 : f32 to vector<2x128xf32>
    %288 = arith.addf %287, %286 : vector<2x128xf32>
    %289 = arith.divf %287, %288 : vector<2x128xf32>
    %290 = math.tanh %284 : vector<2x128xf32>
    %291 = vector.extract_strided_slice %289 {offsets = [0, 0], sizes = [2, 32], strides = [1, 1]} : vector<2x128xf32> to vector<2x32xf32>
    %292 = vector.extract_strided_slice %289 {offsets = [0, 32], sizes = [2, 32], strides = [1, 1]} : vector<2x128xf32> to vector<2x32xf32>
    %293 = vector.extract_strided_slice %290 {offsets = [0, 64], sizes = [2, 32], strides = [1, 1]} : vector<2x128xf32> to vector<2x32xf32>
    %294 = vector.extract_strided_slice %289 {offsets = [0, 96], sizes = [2, 32], strides = [1, 1]} : vector<2x128xf32> to vector<2x32xf32>
    %295 = arith.mulf %292, %258 : vector<2x32xf32>
    %296 = arith.mulf %291, %293 : vector<2x32xf32>
    %297 = arith.addf %295, %296 : vector<2x32xf32>
    %298 = math.tanh %297 : vector<2x32xf32>
    %299 = arith.mulf %294, %298 : vector<2x32xf32>
    %cst_60 = arith.constant dense<0.000000e+00> : vector<2x128xf32>
    %300 = tpu.matmul %299, %1, %cst_60 {dimension_numbers = #tpu.dot_dimension_numbers<[1], [0], [0], [1], [0, 0, 1, 1], [], []>} : vector<2x32xf32>, vector<32x128xf32>, vector<2x128xf32> -> vector<2x128xf32>
    %cst_61 = arith.constant dense<0.000000e+00> : vector<2x128xf32>
    %301 = tpu.matmul %279, %2, %cst_61 {dimension_numbers = #tpu.dot_dimension_numbers<[1], [0], [0], [1], [0, 0, 1, 1], [], []>} : vector<2x32xf32>, vector<32x128xf32>, vector<2x128xf32> -> vector<2x128xf32>
    %302 = arith.addf %300, %301 : vector<2x128xf32>
    %303 = arith.addf %302, %5 : vector<2x128xf32>
    %304 = arith.negf %303 : vector<2x128xf32>
    %305 = math.exp %304 : vector<2x128xf32>
    %cst_62 = arith.constant 1.000000e+00 : f32
    %306 = vector.broadcast %cst_62 : f32 to vector<2x128xf32>
    %307 = arith.addf %306, %305 : vector<2x128xf32>
    %308 = arith.divf %306, %307 : vector<2x128xf32>
    %309 = math.tanh %303 : vector<2x128xf32>
    %310 = vector.extract_strided_slice %308 {offsets = [0, 0], sizes = [2, 32], strides = [1, 1]} : vector<2x128xf32> to vector<2x32xf32>
    %311 = vector.extract_strided_slice %308 {offsets = [0, 32], sizes = [2, 32], strides = [1, 1]} : vector<2x128xf32> to vector<2x32xf32>
    %312 = vector.extract_strided_slice %309 {offsets = [0, 64], sizes = [2, 32], strides = [1, 1]} : vector<2x128xf32> to vector<2x32xf32>
    %313 = vector.extract_strided_slice %308 {offsets = [0, 96], sizes = [2, 32], strides = [1, 1]} : vector<2x128xf32> to vector<2x32xf32>
    %314 = arith.mulf %311, %277 : vector<2x32xf32>
    %315 = arith.mulf %310, %312 : vector<2x32xf32>
    %316 = arith.addf %314, %315 : vector<2x32xf32>
    %317 = math.tanh %316 : vector<2x32xf32>
    %318 = arith.mulf %313, %317 : vector<2x32xf32>
    %c8_i32 = arith.constant 8 : i32
    %c0_63 = arith.constant 0 : index
    %c0_64 = arith.constant 0 : index
    %319 = vector.load %arg6[%c0_63, %c0_64] : memref<32x1xf32, #tpu.memory_space<vmem>>, vector<32x1xf32>
    %cst_65 = arith.constant dense<0.000000e+00> : vector<2x1xf32>
    %320 = tpu.matmul %318, %319, %cst_65 {dimension_numbers = #tpu.dot_dimension_numbers<[1], [0], [0], [1], [0, 0, 1, 1], [], []>} : vector<2x32xf32>, vector<32x1xf32>, vector<2x1xf32> -> vector<2x1xf32>
    %c0_66 = arith.constant 0 : index
    %c0_67 = arith.constant 0 : index
    %321 = vector.load %arg7[%c0_66, %c0_67] : memref<1x1xf32, #tpu.memory_space<vmem>>, vector<1x1xf32>
    %322 = vector.broadcast %321 : vector<1x1xf32> to vector<2x1xf32>
    %323 = arith.addf %320, %322 : vector<2x1xf32>
    %c0_68 = arith.constant 0 : index
    %c0_69 = arith.constant 0 : index
    %324 = vector.load %arg8[%c0_68, %c0_69] : memref<2x1xf32, #tpu.memory_space<vmem>>, vector<2x1xf32>
    tpu.vector_store %arg8[%c0_68, %c0_69], %323 {strides = array<i32>} : memref<2x1xf32, #tpu.memory_space<vmem>>, vector<2x1xf32>,
    return
  }
  func.func @transform_0(%arg0: i32) -> (i32, i32, i32) {
    %c0_i32 = arith.constant 0 : i32
    %c0_i32_0 = arith.constant 0 : i32
    %c0_i32_1 = arith.constant 0 : i32
    return %c0_i32, %arg0, %c0_i32_0 : i32, i32, i32
  }
  func.func @transform_1(%arg0: i32) -> (i32, i32) {
    %c0_i32 = arith.constant 0 : i32
    %c0_i32_0 = arith.constant 0 : i32
    %c0_i32_1 = arith.constant 0 : i32
    return %c0_i32, %c0_i32_0 : i32, i32
  }
  func.func @transform_2(%arg0: i32) -> (i32, i32) {
    %c0_i32 = arith.constant 0 : i32
    %c0_i32_0 = arith.constant 0 : i32
    %c0_i32_1 = arith.constant 0 : i32
    return %c0_i32, %c0_i32_0 : i32, i32
  }
  func.func @transform_3(%arg0: i32) -> (i32, i32) {
    %c0_i32 = arith.constant 0 : i32
    %c0_i32_0 = arith.constant 0 : i32
    %c0_i32_1 = arith.constant 0 : i32
    return %c0_i32, %c0_i32_0 : i32, i32
  }
  func.func @transform_4(%arg0: i32) -> (i32, i32) {
    %c0_i32 = arith.constant 0 : i32
    %c0_i32_0 = arith.constant 0 : i32
    %c0_i32_1 = arith.constant 0 : i32
    return %c0_i32, %c0_i32_0 : i32, i32
  }
  func.func @transform_5(%arg0: i32) -> (i32, i32) {
    %c0_i32 = arith.constant 0 : i32
    %c0_i32_0 = arith.constant 0 : i32
    %c0_i32_1 = arith.constant 0 : i32
    return %c0_i32, %c0_i32_0 : i32, i32
  }
  func.func @transform_6(%arg0: i32) -> (i32, i32) {
    %c0_i32 = arith.constant 0 : i32
    %c0_i32_0 = arith.constant 0 : i32
    %c0_i32_1 = arith.constant 0 : i32
    return %c0_i32, %c0_i32_0 : i32, i32
  }
  func.func @transform_7(%arg0: i32) -> (i32, i32) {
    %c0_i32 = arith.constant 0 : i32
    %c0_i32_0 = arith.constant 0 : i32
    return %arg0, %c0_i32 : i32, i32
  }
}

</mosaic_0001>

<llo_original>
// kernel: tpu_custom_call.1
$region0: #{tpu_custom_call.1}
  #allocation0 [shape = 'u32[]', space=smem, size = 0x4, offset = 0x4, fixed_abs, tag = 'smem constant byte address 0x4 - core index']
  #allocation1 [shape = 'u32[144,128]{1,0:T(1,128)}', space=vmem, size = 0x12000, scoped, tag = 'internal scratch']
  #allocation2 [shape = 'f32[1,1]{1,0:T(1,128)S(1)}', space=vmem, size = 0x200, scoped, tag = 'scoped memory for tpu_custom_call.1']
  %s0 = inlined_call_operand.hbm [shape: f32[8,2,128], index: 0, kind: input, shape index: {}]
  %s1 = inlined_call_operand.vmem [shape: f32[32,128], index: 1, kind: input, shape index: {}]
  %s2 = inlined_call_operand.hbm [shape: f32[32,128], index: 2, kind: input, shape index: {}]
  %s3 = inlined_call_operand.hbm [shape: f32[32,128], index: 3, kind: input, shape index: {}]
  %s4 = inlined_call_operand.vmem [shape: f32[1,128], index: 4, kind: input, shape index: {}]
  %s5 = inlined_call_operand.vmem [shape: f32[32,1], index: 5, kind: input, shape index: {}]
  %s6 = inlined_call_operand.<no memory space> [shape: f32[1,1], index: 6, kind: input, shape index: {}]
  %s7 = inlined_call_operand.vmem [shape: f32[2,1], index: 7, kind: output, shape index: {}]
  %s8 = sld [smem:[#allocation0]]
  $region50: #{tpu_custom_call.1} parent=0
    _
  %s10 = ssub.s32 1, %s8
  %s11 = scalar_select 0, %s10, %s8
  %v12 = vstv %s6
  %13 = vst [vmem:[#allocation2] sm:$0x1] %v12
  $region1: #{tpu_custom_call.1} parent=0
    #allocation3 [shape = 'u8[8192]{0}', space=vmem, size = 0x2000, scoped, tag = 'input window, operand 0, single buffered']
    #allocation4 [shape = 's32[1]{0}', space=sflag, size = 0x4, scoped, tag = 'scoped memory for tpu_custom_call.1']
    #allocation5 [shape = 'u8[16384]{0}', space=vmem, size = 0x4000, scoped, tag = 'input window, operand 2, single buffered']
    #allocation6 [shape = 's32[1]{0}', space=sflag, size = 0x4, scoped, tag = 'scoped memory for tpu_custom_call.1']
    #allocation7 [shape = 'u8[16384]{0}', space=vmem, size = 0x4000, scoped, tag = 'input window, operand 3, single buffered']
    %14 = vsyncpa [#allocation4], 0
    %15 = vsyncpa [#allocation6], 0
    // Predicated region
    $region2: #{tpu_custom_call.1} parent=1 // pred_check
      _
    $region3: #{tpu_custom_call.1} parent=1 // pred_check_branch
      %17 = sbr.rel (0) target = $region5
    $region4: #{tpu_custom_call.1} parent=1 // pred_region
      %s19 = ssub.s32 256, 256
      %20 = vsyncadd [#allocation4], %s19
      %s21 = sshll.u32 [#allocation3], 4
      %s22 = int_to_ptr.vmem [resolvable:$true] %s21
      %27 = dma.hbm_to_vmem [thread:$0]  %s0, 256, %s22, [#allocation4], 32, 32, 2
    $region5: #{tpu_custom_call.1} parent=1 // pred_fallthru
      _
    // Predicated region
    $region6: #{tpu_custom_call.1} parent=1 // pred_check
      _
    $region7: #{tpu_custom_call.1} parent=1 // pred_check_branch
      %29 = sbr.rel (0) target = $region9
    $region8: #{tpu_custom_call.1} parent=1 // pred_region
      _
    $region9: #{tpu_custom_call.1} parent=1 // pred_fallthru
      _
    // Predicated region
    $region10: #{tpu_custom_call.1} parent=1 // pred_check
      _
    $region11: #{tpu_custom_call.1} parent=1 // pred_check_branch
      %31 = sbr.rel (0) target = $region13
    $region12: #{tpu_custom_call.1} parent=1 // pred_region
      %s33 = ssub.s32 512, 512
      %34 = vsyncadd [#allocation6], %s33
      %s35 = sshll.u32 [#allocation5], 4
      %s36 = int_to_ptr.vmem [resolvable:$true] %s35
      %41 = dma.hbm_to_vmem [thread:$0]  %s2, 512, %s36, [#allocation6], 128, 128, 8
    $region13: #{tpu_custom_call.1} parent=1 // pred_fallthru
      _
    // Predicated region
    $region14: #{tpu_custom_call.1} parent=1 // pred_check
      _
    $region15: #{tpu_custom_call.1} parent=1 // pred_check_branch
      %43 = sbr.rel (0) target = $region17
    $region16: #{tpu_custom_call.1} parent=1 // pred_region
      %s45 = ssub.s32 512, 512
      %46 = vsyncadd [#allocation6], %s45
      %s47 = sshll.u32 [#allocation7], 4
      %s48 = int_to_ptr.vmem [resolvable:$true] %s47
      %53 = dma.hbm_to_vmem [thread:$0]  %s3, 512, %s48, [#allocation6], 128, 128, 8
    $region17: #{tpu_custom_call.1} parent=1 // pred_fallthru
      _
    // Predicated region
    $region18: #{tpu_custom_call.1} parent=1 // pred_check
      _
    $region19: #{tpu_custom_call.1} parent=1 // pred_check_branch
      %55 = sbr.rel (0) target = $region21
    $region20: #{tpu_custom_call.1} parent=1 // pred_region
      _
    $region21: #{tpu_custom_call.1} parent=1 // pred_fallthru
      _
    // Predicated region
    $region22: #{tpu_custom_call.1} parent=1 // pred_check
      _
    $region23: #{tpu_custom_call.1} parent=1 // pred_check_branch
      %57 = sbr.rel (0) target = $region25
    $region24: #{tpu_custom_call.1} parent=1 // pred_region
      _
    $region25: #{tpu_custom_call.1} parent=1 // pred_fallthru
      _
    // Predicated region
    $region26: #{tpu_custom_call.1} parent=1 // pred_check
      _
    $region27: #{tpu_custom_call.1} parent=1 // pred_check_branch
      %59 = sbr.rel (0) target = $region29
    $region28: #{tpu_custom_call.1} parent=1 // pred_region
      _
    $region29: #{tpu_custom_call.1} parent=1 // pred_fallthru
      _
    // Predicated region
    $region30: #{tpu_custom_call.1} parent=1 // pred_check
      _
    $region31: #{tpu_custom_call.1} parent=1 // pred_check_branch
      %61 = sbr.rel (0) target = $region33
    $region32: #{tpu_custom_call.1} parent=1 // pred_region
      %62 = dma.done [#allocation4], 256
    $region33: #{tpu_custom_call.1} parent=1 // pred_fallthru
      _
    // Predicated region
    $region34: #{tpu_custom_call.1} parent=1 // pred_check
      _
    $region35: #{tpu_custom_call.1} parent=1 // pred_check_branch
      %64 = sbr.rel (0) target = $region37
    $region36: #{tpu_custom_call.1} parent=1 // pred_region
      %65 = dma.done [#allocation6], 512
    $region37: #{tpu_custom_call.1} parent=1 // pred_fallthru
      _
    // Predicated region
    $region38: #{tpu_custom_call.1} parent=1 // pred_check
      _
    $region39: #{tpu_custom_call.1} parent=1 // pred_check_branch
      %67 = sbr.rel (0) target = $region41
    $region40: #{tpu_custom_call.1} parent=1 // pred_region
      %68 = dma.done [#allocation6], 512
    $region41: #{tpu_custom_call.1} parent=1 // pred_fallthru
      _
    %v69 = vld [vmem:[%s1] sm:$0xff]
    %v70 = vld [vmem:[%s1 + $0x8] sm:$0xff]
    %v71 = vld [vmem:[%s1 + $0x10] sm:$0xff]
    %v72 = vld [vmem:[%s1 + $0x18] sm:$0xff]
    %v73 = vld [vmem:[#allocation5] sm:$0xff]
    %v74 = vld [vmem:[#allocation5 + $0x8] sm:$0xff]
    %v75 = vld [vmem:[#allocation5 + $0x10] sm:$0xff]
    %v76 = vld [vmem:[#allocation5 + $0x18] sm:$0xff]
    %v77 = vld [vmem:[#allocation7] sm:$0xff]
    %v78 = vld [vmem:[#allocation7 + $0x8] sm:$0xff]
    %v79 = vld [vmem:[#allocation7 + $0x10] sm:$0xff]
    %v80 = vld [vmem:[#allocation7 + $0x18] sm:$0xff]
    %v81 = vld [vmem:[%s4] sm:$0x1]
    %v83 = vlaneseq
    %v84 = vshrl.u32 %v83, 7
    %v85 = vsub.s32 0, %v84
    %v86 = vrot.slane %v81, %v85
    %v88 = vld [vmem:[#allocation3] sm:$0x3]
    %vm89 = vcmask 261120
    %v91 = vsel %vm89, 0.0, 0
    %93 = vmatprep.subr.mxu0 0.0
    %94 = vmatpush1.msra.mxu0 %v69
    %95 = vmatprep.subr.mxu0 0.0
    %96 = vmatpush1.msra.mxu0 %v70
    %97 = vmatprep.subr.mxu0 0.0
    %98 = vmatpush1.msra.mxu0 %v71
    %99 = vmatprep.subr.mxu0 0.0
    %100 = vmatpush1.msra.mxu0 %v72
    %101 = vmatprep.subr.mxu0 0.0
    %102 = vmatpush1.msra.mxu0 0.0
    %103 = vmatprep.subr.mxu0 0.0
    %104 = vmatpush1.msra.mxu0 0.0
    %105 = vmatprep.subr.mxu0 0.0
    %106 = vmatpush1.msra.mxu0 0.0
    %107 = vmatprep.subr.mxu0 0.0
    %108 = vmatpush1.msra.mxu0 0.0
    %109 = vmatprep.subr.mxu0 0.0
    %110 = vmatpush1.msra.mxu0 0.0
    %111 = vmatprep.subr.mxu0 0.0
    %112 = vmatpush1.msra.mxu0 0.0
    %113 = vmatprep.subr.mxu0 0.0
    %114 = vmatpush1.msra.mxu0 0.0
    %115 = vmatprep.subr.mxu0 0.0
    %116 = vmatpush1.msra.mxu0 0.0
    %117 = vmatprep.subr.mxu0 0.0
    %118 = vmatpush1.msra.mxu0 0.0
    %119 = vmatprep.subr.mxu0 0.0
    %120 = vmatpush1.msra.mxu0 0.0
    %121 = vmatprep.subr.mxu0 0.0
    %122 = vmatpush1.msra.mxu0 0.0
    %123 = vmatprep.subr.mxu0 0.0
    %124 = vmatpush1.msra.mxu0 0.0
    %125 = vmatprep.subr.mxu0 0.0
    %126 = vmatpush1.msra.mxu0 0.0
    %127 = vmatprep.subr.mxu0 0.0
    %128 = vmatpush1.msra.mxu0 0.0
    %129 = vmatprep.subr.mxu0 0.0
    %130 = vmatpush1.msra.mxu0 0.0
    %131 = vmatprep.subr.mxu0 0.0
    %132 = vmatpush1.msra.mxu0 0.0
    %133 = vmatprep.subr.mxu0 0.0
    %134 = vmatpush1.msra.mxu0 0.0
    %135 = vmatprep.subr.mxu0 0.0
    %136 = vmatpush1.msra.mxu0 0.0
    %137 = vmatprep.subr.mxu0 0.0
    %138 = vmatpush1.msra.mxu0 0.0
    %139 = vmatprep.subr.mxu0 0.0
    %140 = vmatpush1.msra.mxu0 0.0
    %141 = vmatprep.subr.mxu0 0.0
    %142 = vmatpush1.msra.mxu0 0.0
    %143 = vmatprep.subr.mxu0 0.0
    %144 = vmatpush1.msra.mxu0 0.0
    %145 = vmatprep.subr.mxu0 0.0
    %146 = vmatpush1.msra.mxu0 0.0
    %147 = vmatprep.subr.mxu0 0.0
    %148 = vmatpush1.msra.mxu0 0.0
    %149 = vmatprep.subr.mxu0 0.0
    %150 = vmatpush1.msra.mxu0 0.0
    %151 = vmatprep.subr.mxu0 0.0
    %152 = vmatpush1.msra.mxu0 0.0
    %153 = vmatprep.subr.mxu0 0.0
    %154 = vmatpush1.msra.mxu0 0.0
    %155 = vmatprep.subr.mxu0 0.0
    %156 = vmatpush1.msra.mxu0 0.0
    %157 = vmatprep.mubr.f32.mxu0 0.0
    %158 = vmatmul.mubr.f32.gmra.mrb[0].mxu0 %v91
    %v159 = vpop.f32.mrb[0].mxu0
    %v160 = vadd.f32 0.0, %v159
    %v161 = vpop.f32.mrb[0].mxu0
    %162 = vdwg.mxu0
    %v163 = vadd.f32 %v88, %v160
    %v164 = vxor.u32 %v163, 2147483648
    %v165 = vmul.f32 %v164, 1.442695
    %v166 = vpow.pop %v165
    %v167 = vadd.f32 %v166, 1.0
    %v168 = vrcp.pop %v167
    %v169 = vmul.f32 1.0, %v168
    %v170 = vtanh.pop %v163
    %v171 = vmul.f32 %v169, 0.0
    %173 = vrot.lane.b32.xlu0 %v170, 64
    %v174 = vpop.permute.xlu0 %173
    %v176 = vmul.f32 %v169, %v174
    %178 = vrot.lane.b32.xlu0 %v176, 32
    %v179 = vpop.permute.xlu0 %178
    %v181 = vadd.f32 %v171, %v179
    %v182 = vtanh.pop %v181
    %184 = vrot.lane.b32.xlu0 %v182, 64
    %v185 = vpop.permute.xlu0 %184
    %v187 = vmul.f32 %v169, %v185
    %188 = vmatprep.subr.mxu0 0.0
    %189 = vmatpush1.msra.mxu0 %v77
    %190 = vmatprep.subr.mxu0 0.0
    %191 = vmatpush1.msra.mxu0 %v78
    %192 = vmatprep.subr.mxu0 0.0
    %193 = vmatpush1.msra.mxu0 %v79
    %194 = vmatprep.subr.mxu0 0.0
    %195 = vmatpush1.msra.mxu0 %v80
    %196 = vmatprep.subr.mxu0 0.0
    %197 = vmatpush1.msra.mxu0 0.0
    %198 = vmatprep.subr.mxu0 0.0
    %199 = vmatpush1.msra.mxu0 0.0
    %200 = vmatprep.subr.mxu0 0.0
    %201 = vmatpush1.msra.mxu0 0.0
    %202 = vmatprep.subr.mxu0 0.0
    %203 = vmatpush1.msra.mxu0 0.0
    %204 = vmatprep.subr.mxu0 0.0
    %205 = vmatpush1.msra.mxu0 0.0
    %206 = vmatprep.subr.mxu0 0.0
    %207 = vmatpush1.msra.mxu0 0.0
    %208 = vmatprep.subr.mxu0 0.0
    %209 = vmatpush1.msra.mxu0 0.0
    %210 = vmatprep.subr.mxu0 0.0
    %211 = vmatpush1.msra.mxu0 0.0
    %212 = vmatprep.subr.mxu0 0.0
    %213 = vmatpush1.msra.mxu0 0.0
    %214 = vmatprep.subr.mxu0 0.0
    %215 = vmatpush1.msra.mxu0 0.0
    %216 = vmatprep.subr.mxu0 0.0
    %217 = vmatpush1.msra.mxu0 0.0
    %218 = vmatprep.subr.mxu0 0.0
    %219 = vmatpush1.msra.mxu0 0.0
    %220 = vmatprep.subr.mxu0 0.0
    %221 = vmatpush1.msra.mxu0 0.0
    %222 = vmatprep.subr.mxu0 0.0
    %223 = vmatpush1.msra.mxu0 0.0
    %224 = vmatprep.subr.mxu0 0.0
    %225 = vmatpush1.msra.mxu0 0.0
    %226 = vmatprep.subr.mxu0 0.0
    %227 = vmatpush1.msra.mxu0 0.0
    %228 = vmatprep.subr.mxu0 0.0
    %229 = vmatpush1.msra.mxu0 0.0
    %230 = vmatprep.subr.mxu0 0.0
    %231 = vmatpush1.msra.mxu0 0.0
    %232 = vmatprep.subr.mxu0 0.0
    %233 = vmatpush1.msra.mxu0 0.0
    %234 = vmatprep.subr.mxu0 0.0
    %235 = vmatpush1.msra.mxu0 0.0
    %236 = vmatprep.subr.mxu0 0.0
    %237 = vmatpush1.msra.mxu0 0.0
    %238 = vmatprep.subr.mxu0 0.0
    %239 = vmatpush1.msra.mxu0 0.0
    %240 = vmatprep.subr.mxu0 0.0
    %241 = vmatpush1.msra.mxu0 0.0
    %242 = vmatprep.subr.mxu0 0.0
    %243 = vmatpush1.msra.mxu0 0.0
    %244 = vmatprep.subr.mxu0 0.0
    %245 = vmatpush1.msra.mxu0 0.0
    %246 = vmatprep.subr.mxu0 0.0
    %247 = vmatpush1.msra.mxu0 0.0
    %248 = vmatprep.subr.mxu0 0.0
    %249 = vmatpush1.msra.mxu0 0.0
    %250 = vmatprep.subr.mxu0 0.0
    %251 = vmatpush1.msra.mxu0 0.0
    %252 = vmatprep.mubr.f32.mxu0 0.0
    %253 = vmatmul.mubr.f32.gmra.mrb[0].mxu0 %v91
    %v254 = vpop.f32.mrb[0].mxu0
    %v255 = vadd.f32 0.0, %v254
    %v256 = vpop.f32.mrb[0].mxu0
    %257 = vdwg.mxu0
    %259 = vrot.lane.b32.xlu0 %v187, 32
    %v260 = vpop.permute.xlu0 %259
    %v261 = vsel %vm89, %v260, 0
    %263 = vmatprep.subr.mxu0 0.0
    %264 = vmatpush1.msra.mxu0 %v73
    %265 = vmatprep.subr.mxu0 0.0
    %266 = vmatpush1.msra.mxu0 %v74
    %267 = vmatprep.subr.mxu0 0.0
    %268 = vmatpush1.msra.mxu0 %v75
    %269 = vmatprep.subr.mxu0 0.0
    %270 = vmatpush1.msra.mxu0 %v76
    %271 = vmatprep.subr.mxu0 0.0
    %272 = vmatpush1.msra.mxu0 0.0
    %273 = vmatprep.subr.mxu0 0.0
    %274 = vmatpush1.msra.mxu0 0.0
    %275 = vmatprep.subr.mxu0 0.0
    %276 = vmatpush1.msra.mxu0 0.0
    %277 = vmatprep.subr.mxu0 0.0
    %278 = vmatpush1.msra.mxu0 0.0
    %279 = vmatprep.subr.mxu0 0.0
    %280 = vmatpush1.msra.mxu0 0.0
    %281 = vmatprep.subr.mxu0 0.0
    %282 = vmatpush1.msra.mxu0 0.0
    %283 = vmatprep.subr.mxu0 0.0
    %284 = vmatpush1.msra.mxu0 0.0
    %285 = vmatprep.subr.mxu0 0.0
    %286 = vmatpush1.msra.mxu0 0.0
    %287 = vmatprep.subr.mxu0 0.0
    %288 = vmatpush1.msra.mxu0 0.0
    %289 = vmatprep.subr.mxu0 0.0
    %290 = vmatpush1.msra.mxu0 0.0
    %291 = vmatprep.subr.mxu0 0.0
    %292 = vmatpush1.msra.mxu0 0.0
    %293 = vmatprep.subr.mxu0 0.0
    %294 = vmatpush1.msra.mxu0 0.0
    %295 = vmatprep.subr.mxu0 0.0
    %296 = vmatpush1.msra.mxu0 0.0
    %297 = vmatprep.subr.mxu0 0.0
    %298 = vmatpush1.msra.mxu0 0.0
    %299 = vmatprep.subr.mxu0 0.0
    %300 = vmatpush1.msra.mxu0 0.0
    %301 = vmatprep.subr.mxu0 0.0
    %302 = vmatpush1.msra.mxu0 0.0
    %303 = vmatprep.subr.mxu0 0.0
    %304 = vmatpush1.msra.mxu0 0.0
    %305 = vmatprep.subr.mxu0 0.0
    %306 = vmatpush1.msra.mxu0 0.0
    %307 = vmatprep.subr.mxu0 0.0
    %308 = vmatpush1.msra.mxu0 0.0
    %309 = vmatprep.subr.mxu0 0.0
    %310 = vmatpush1.msra.mxu0 0.0
    %311 = vmatprep.subr.mxu0 0.0
    %312 = vmatpush1.msra.mxu0 0.0
    %313 = vmatprep.subr.mxu0 0.0
    %314 = vmatpush1.msra.mxu0 0.0
    %315 = vmatprep.subr.mxu0 0.0
    %316 = vmatpush1.msra.mxu0 0.0
    %317 = vmatprep.subr.mxu0 0.0
    %318 = vmatpush1.msra.mxu0 0.0
    %319 = vmatprep.subr.mxu0 0.0
    %320 = vmatpush1.msra.mxu0 0.0
    %321 = vmatprep.subr.mxu0 0.0
    %322 = vmatpush1.msra.mxu0 0.0
    %323 = vmatprep.subr.mxu0 0.0
    %324 = vmatpush1.msra.mxu0 0.0
    %325 = vmatprep.subr.mxu0 0.0
    %326 = vmatpush1.msra.mxu0 0.0
    %327 = vmatprep.mubr.f32.mxu0 0.0
    %328 = vmatmul.mubr.f32.gmra.mrb[0].mxu0 %v261
    %v329 = vpop.f32.mrb[0].mxu0
    %v330 = vadd.f32 %v255, %v329
    %v331 = vpop.f32.mrb[0].mxu0
    %332 = vdwg.mxu0
    %v333 = vadd.f32 %v330, %v86
    %v334 = vxor.u32 %v333, 2147483648
    %v335 = vmul.f32 %v334, 1.442695
    %v336 = vpow.pop %v335
    %v337 = vadd.f32 %v336, 1.0
    %v338 = vrcp.pop %v337
    %v339 = vmul.f32 1.0, %v338
    %v340 = vtanh.pop %v333
    %v341 = vmul.f32 %v339, 0.0
    %343 = vrot.lane.b32.xlu0 %v340, 64
    %v344 = vpop.permute.xlu0 %343
    %v346 = vmul.f32 %v339, %v344
    %348 = vrot.lane.b32.xlu0 %v346, 32
    %v349 = vpop.permute.xlu0 %348
    %v351 = vadd.f32 %v341, %v349
    %v352 = vtanh.pop %v351
    %354 = vrot.lane.b32.xlu0 %v352, 64
    %v355 = vpop.permute.xlu0 %354
    %v357 = vmul.f32 %v339, %v355
    %s358 = scalar_lea.vmem [#allocation3], 2
    %v359 = vld [vmem:[%s358] sm:$0x3]
    %360 = vmatprep.subr.mxu0 0.0
    %361 = vmatpush1.msra.mxu0 %v69
    %362 = vmatprep.subr.mxu0 0.0
    %363 = vmatpush1.msra.mxu0 %v70
    %364 = vmatprep.subr.mxu0 0.0
    %365 = vmatpush1.msra.mxu0 %v71
    %366 = vmatprep.subr.mxu0 0.0
    %367 = vmatpush1.msra.mxu0 %v72
    %368 = vmatprep.subr.mxu0 0.0
    %369 = vmatpush1.msra.mxu0 0.0
    %370 = vmatprep.subr.mxu0 0.0
    %371 = vmatpush1.msra.mxu0 0.0
    %372 = vmatprep.subr.mxu0 0.0
    %373 = vmatpush1.msra.mxu0 0.0
    %374 = vmatprep.subr.mxu0 0.0
    %375 = vmatpush1.msra.mxu0 0.0
    %376 = vmatprep.subr.mxu0 0.0
    %377 = vmatpush1.msra.mxu0 0.0
    %378 = vmatprep.subr.mxu0 0.0
    %379 = vmatpush1.msra.mxu0 0.0
    %380 = vmatprep.subr.mxu0 0.0
    %381 = vmatpush1.msra.mxu0 0.0
    %382 = vmatprep.subr.mxu0 0.0
    %383 = vmatpush1.msra.mxu0 0.0
    %384 = vmatprep.subr.mxu0 0.0
    %385 = vmatpush1.msra.mxu0 0.0
    %386 = vmatprep.subr.mxu0 0.0
    %387 = vmatpush1.msra.mxu0 0.0
    %388 = vmatprep.subr.mxu0 0.0
    %389 = vmatpush1.msra.mxu0 0.0
    %390 = vmatprep.subr.mxu0 0.0
    %391 = vmatpush1.msra.mxu0 0.0
    %392 = vmatprep.subr.mxu0 0.0
    %393 = vmatpush1.msra.mxu0 0.0
    %394 = vmatprep.subr.mxu0 0.0
    %395 = vmatpush1.msra.mxu0 0.0
    %396 = vmatprep.subr.mxu0 0.0
    %397 = vmatpush1.msra.mxu0 0.0
    %398 = vmatprep.subr.mxu0 0.0
    %399 = vmatpush1.msra.mxu0 0.0
    %400 = vmatprep.subr.mxu0 0.0
    %401 = vmatpush1.msra.mxu0 0.0
    %402 = vmatprep.subr.mxu0 0.0
    %403 = vmatpush1.msra.mxu0 0.0
    %404 = vmatprep.subr.mxu0 0.0
    %405 = vmatpush1.msra.mxu0 0.0
    %406 = vmatprep.subr.mxu0 0.0
    %407 = vmatpush1.msra.mxu0 0.0
    %408 = vmatprep.subr.mxu0 0.0
    %409 = vmatpush1.msra.mxu0 0.0
    %410 = vmatprep.subr.mxu0 0.0
    %411 = vmatpush1.msra.mxu0 0.0
    %412 = vmatprep.subr.mxu0 0.0
    %413 = vmatpush1.msra.mxu0 0.0
    %414 = vmatprep.subr.mxu0 0.0
    %415 = vmatpush1.msra.mxu0 0.0
    %416 = vmatprep.subr.mxu0 0.0
    %417 = vmatpush1.msra.mxu0 0.0
    %418 = vmatprep.subr.mxu0 0.0
    %419 = vmatpush1.msra.mxu0 0.0
    %420 = vmatprep.subr.mxu0 0.0
    %421 = vmatpush1.msra.mxu0 0.0
    %422 = vmatprep.subr.mxu0 0.0
    %423 = vmatpush1.msra.mxu0 0.0
    %424 = vmatprep.mubr.f32.mxu0 0.0
    %425 = vmatmul.mubr.f32.gmra.mrb[0].mxu0 %v261
    %v426 = vpop.f32.mrb[0].mxu0
    %v427 = vadd.f32 0.0, %v426
    %v428 = vpop.f32.mrb[0].mxu0
    %429 = vdwg.mxu0
    %v430 = vadd.f32 %v359, %v427
    %v431 = vxor.u32 %v430, 2147483648
    %v432 = vmul.f32 %v431, 1.442695
    %v433 = vpow.pop %v432
    %v434 = vadd.f32 %v433, 1.0
    %v435 = vrcp.pop %v434
    %v436 = vmul.f32 1.0, %v435
    %v437 = vtanh.pop %v430
    %v438 = vmul.f32 %v436, %v181
    %440 = vrot.lane.b32.xlu0 %v437, 64
    %v441 = vpop.permute.xlu0 %440
    %v443 = vmul.f32 %v436, %v441
    %445 = vrot.lane.b32.xlu0 %v443, 32
    %v446 = vpop.permute.xlu0 %445
    %v448 = vadd.f32 %v438, %v446
    %v449 = vtanh.pop %v448
    %451 = vrot.lane.b32.xlu0 %v449, 64
    %v452 = vpop.permute.xlu0 %451
    %v454 = vmul.f32 %v436, %v452
    %456 = vrot.lane.b32.xlu0 %v357, 32
    %v457 = vpop.permute.xlu0 %456
    %v458 = vsel %vm89, %v457, 0
    %460 = vmatprep.subr.mxu0 0.0
    %461 = vmatpush1.msra.mxu0 %v77
    %462 = vmatprep.subr.mxu0 0.0
    %463 = vmatpush1.msra.mxu0 %v78
    %464 = vmatprep.subr.mxu0 0.0
    %465 = vmatpush1.msra.mxu0 %v79
    %466 = vmatprep.subr.mxu0 0.0
    %467 = vmatpush1.msra.mxu0 %v80
    %468 = vmatprep.subr.mxu0 0.0
    %469 = vmatpush1.msra.mxu0 0.0
    %470 = vmatprep.subr.mxu0 0.0
    %471 = vmatpush1.msra.mxu0 0.0
    %472 = vmatprep.subr.mxu0 0.0
    %473 = vmatpush1.msra.mxu0 0.0
    %474 = vmatprep.subr.mxu0 0.0
    %475 = vmatpush1.msra.mxu0 0.0
    %476 = vmatprep.subr.mxu0 0.0
    %477 = vmatpush1.msra.mxu0 0.0
    %478 = vmatprep.subr.mxu0 0.0
    %479 = vmatpush1.msra.mxu0 0.0
    %480 = vmatprep.subr.mxu0 0.0
    %481 = vmatpush1.msra.mxu0 0.0
    %482 = vmatprep.subr.mxu0 0.0
    %483 = vmatpush1.msra.mxu0 0.0
    %484 = vmatprep.subr.mxu0 0.0
    %485 = vmatpush1.msra.mxu0 0.0
    %486 = vmatprep.subr.mxu0 0.0
    %487 = vmatpush1.msra.mxu0 0.0
    %488 = vmatprep.subr.mxu0 0.0
    %489 = vmatpush1.msra.mxu0 0.0
    %490 = vmatprep.subr.mxu0 0.0
    %491 = vmatpush1.msra.mxu0 0.0
    %492 = vmatprep.subr.mxu0 0.0
    %493 = vmatpush1.msra.mxu0 0.0
    %494 = vmatprep.subr.mxu0 0.0
    %495 = vmatpush1.msra.mxu0 0.0
    %496 = vmatprep.subr.mxu0 0.0
    %497 = vmatpush1.msra.mxu0 0.0
    %498 = vmatprep.subr.mxu0 0.0
    %499 = vmatpush1.msra.mxu0 0.0
    %500 = vmatprep.subr.mxu0 0.0
    %501 = vmatpush1.msra.mxu0 0.0
    %502 = vmatprep.subr.mxu0 0.0
    %503 = vmatpush1.msra.mxu0 0.0
    %504 = vmatprep.subr.mxu0 0.0
    %505 = vmatpush1.msra.mxu0 0.0
    %506 = vmatprep.subr.mxu0 0.0
    %507 = vmatpush1.msra.mxu0 0.0
    %508 = vmatprep.subr.mxu0 0.0
    %509 = vmatpush1.msra.mxu0 0.0
    %510 = vmatprep.subr.mxu0 0.0
    %511 = vmatpush1.msra.mxu0 0.0
    %512 = vmatprep.subr.mxu0 0.0
    %513 = vmatpush1.msra.mxu0 0.0
    %514 = vmatprep.subr.mxu0 0.0
    %515 = vmatpush1.msra.mxu0 0.0
    %516 = vmatprep.subr.mxu0 0.0
    %517 = vmatpush1.msra.mxu0 0.0
    %518 = vmatprep.subr.mxu0 0.0
    %519 = vmatpush1.msra.mxu0 0.0
    %520 = vmatprep.subr.mxu0 0.0
    %521 = vmatpush1.msra.mxu0 0.0
    %522 = vmatprep.subr.mxu0 0.0
    %523 = vmatpush1.msra.mxu0 0.0
    %524 = vmatprep.mubr.f32.mxu0 0.0
    %525 = vmatmul.mubr.f32.gmra.mrb[0].mxu0 %v458
    %v526 = vpop.f32.mrb[0].mxu0
    %v527 = vadd.f32 0.0, %v526
    %v528 = vpop.f32.mrb[0].mxu0
    %529 = vdwg.mxu0
    %531 = vrot.lane.b32.xlu0 %v454, 32
    %v532 = vpop.permute.xlu0 %531
    %v533 = vsel %vm89, %v532, 0
    %535 = vmatprep.subr.mxu0 0.0
    %536 = vmatpush1.msra.mxu0 %v73
    %537 = vmatprep.subr.mxu0 0.0
    %538 = vmatpush1.msra.mxu0 %v74
    %539 = vmatprep.subr.mxu0 0.0
    %540 = vmatpush1.msra.mxu0 %v75
    %541 = vmatprep.subr.mxu0 0.0
    %542 = vmatpush1.msra.mxu0 %v76
    %543 = vmatprep.subr.mxu0 0.0
    %544 = vmatpush1.msra.mxu0 0.0
    %545 = vmatprep.subr.mxu0 0.0
    %546 = vmatpush1.msra.mxu0 0.0
    %547 = vmatprep.subr.mxu0 0.0
    %548 = vmatpush1.msra.mxu0 0.0
    %549 = vmatprep.subr.mxu0 0.0
    %550 = vmatpush1.msra.mxu0 0.0
    %551 = vmatprep.subr.mxu0 0.0
    %552 = vmatpush1.msra.mxu0 0.0
    %553 = vmatprep.subr.mxu0 0.0
    %554 = vmatpush1.msra.mxu0 0.0
    %555 = vmatprep.subr.mxu0 0.0
    %556 = vmatpush1.msra.mxu0 0.0
    %557 = vmatprep.subr.mxu0 0.0
    %558 = vmatpush1.msra.mxu0 0.0
    %559 = vmatprep.subr.mxu0 0.0
    %560 = vmatpush1.msra.mxu0 0.0
    %561 = vmatprep.subr.mxu0 0.0
    %562 = vmatpush1.msra.mxu0 0.0
    %563 = vmatprep.subr.mxu0 0.0
    %564 = vmatpush1.msra.mxu0 0.0
    %565 = vmatprep.subr.mxu0 0.0
    %566 = vmatpush1.msra.mxu0 0.0
    %567 = vmatprep.subr.mxu0 0.0
    %568 = vmatpush1.msra.mxu0 0.0
    %569 = vmatprep.subr.mxu0 0.0
    %570 = vmatpush1.msra.mxu0 0.0
    %571 = vmatprep.subr.mxu0 0.0
    %572 = vmatpush1.msra.mxu0 0.0
    %573 = vmatprep.subr.mxu0 0.0
    %574 = vmatpush1.msra.mxu0 0.0
    %575 = vmatprep.subr.mxu0 0.0
    %576 = vmatpush1.msra.mxu0 0.0
    %577 = vmatprep.subr.mxu0 0.0
    %578 = vmatpush1.msra.mxu0 0.0
    %579 = vmatprep.subr.mxu0 0.0
    %580 = vmatpush1.msra.mxu0 0.0
    %581 = vmatprep.subr.mxu0 0.0
    %582 = vmatpush1.msra.mxu0 0.0
    %583 = vmatprep.subr.mxu0 0.0
    %584 = vmatpush1.msra.mxu0 0.0
    %585 = vmatprep.subr.mxu0 0.0
    %586 = vmatpush1.msra.mxu0 0.0
    %587 = vmatprep.subr.mxu0 0.0
    %588 = vmatpush1.msra.mxu0 0.0
    %589 = vmatprep.subr.mxu0 0.0
    %590 = vmatpush1.msra.mxu0 0.0
    %591 = vmatprep.subr.mxu0 0.0
    %592 = vmatpush1.msra.mxu0 0.0
    %593 = vmatprep.subr.mxu0 0.0
    %594 = vmatpush1.msra.mxu0 0.0
    %595 = vmatprep.subr.mxu0 0.0
    %596 = vmatpush1.msra.mxu0 0.0
    %597 = vmatprep.subr.mxu0 0.0
    %598 = vmatpush1.msra.mxu0 0.0
    %599 = vmatprep.mubr.f32.mxu0 0.0
    %600 = vmatmul.mubr.f32.gmra.mrb[0].mxu0 %v533
    %v601 = vpop.f32.mrb[0].mxu0
    %v602 = vadd.f32 %v527, %v601
    %v603 = vpop.f32.mrb[0].mxu0
    %604 = vdwg.mxu0
    %v605 = vadd.f32 %v602, %v86
    %v606 = vxor.u32 %v605, 2147483648
    %v607 = vmul.f32 %v606, 1.442695
    %v608 = vpow.pop %v607
    %v609 = vadd.f32 %v608, 1.0
    %v610 = vrcp.pop %v609
    %v611 = vmul.f32 1.0, %v610
    %v612 = vtanh.pop %v605
    %v613 = vmul.f32 %v611, %v351
    %615 = vrot.lane.b32.xlu0 %v612, 64
    %v616 = vpop.permute.xlu0 %615
    %v618 = vmul.f32 %v611, %v616
    %620 = vrot.lane.b32.xlu0 %v618, 32
    %v621 = vpop.permute.xlu0 %620
    %v623 = vadd.f32 %v613, %v621
    %v624 = vtanh.pop %v623
    %626 = vrot.lane.b32.xlu0 %v624, 64
    %v627 = vpop.permute.xlu0 %626
    %v629 = vmul.f32 %v611, %v627
    %s630 = scalar_lea.vmem [#allocation3], 4
    %v631 = vld [vmem:[%s630] sm:$0x3]
    %632 = vmatprep.subr.mxu0 0.0
    %633 = vmatpush1.msra.mxu0 %v69
    %634 = vmatprep.subr.mxu0 0.0
    %635 = vmatpush1.msra.mxu0 %v70
    %636 = vmatprep.subr.mxu0 0.0
    %637 = vmatpush1.msra.mxu0 %v71
    %638 = vmatprep.subr.mxu0 0.0
    %639 = vmatpush1.msra.mxu0 %v72
    %640 = vmatprep.subr.mxu0 0.0
    %641 = vmatpush1.msra.mxu0 0.0
    %642 = vmatprep.subr.mxu0 0.0
    %643 = vmatpush1.msra.mxu0 0.0
    %644 = vmatprep.subr.mxu0 0.0
    %645 = vmatpush1.msra.mxu0 0.0
    %646 = vmatprep.subr.mxu0 0.0
    %647 = vmatpush1.msra.mxu0 0.0
    %648 = vmatprep.subr.mxu0 0.0
    %649 = vmatpush1.msra.mxu0 0.0
    %650 = vmatprep.subr.mxu0 0.0
    %651 = vmatpush1.msra.mxu0 0.0
    %652 = vmatprep.subr.mxu0 0.0
    %653 = vmatpush1.msra.mxu0 0.0
    %654 = vmatprep.subr.mxu0 0.0
    %655 = vmatpush1.msra.mxu0 0.0
    %656 = vmatprep.subr.mxu0 0.0
    %657 = vmatpush1.msra.mxu0 0.0
    %658 = vmatprep.subr.mxu0 0.0
    %659 = vmatpush1.msra.mxu0 0.0
    %660 = vmatprep.subr.mxu0 0.0
    %661 = vmatpush1.msra.mxu0 0.0
    %662 = vmatprep.subr.mxu0 0.0
    %663 = vmatpush1.msra.mxu0 0.0
    %664 = vmatprep.subr.mxu0 0.0
    %665 = vmatpush1.msra.mxu0 0.0
    %666 = vmatprep.subr.mxu0 0.0
    %667 = vmatpush1.msra.mxu0 0.0
    %668 = vmatprep.subr.mxu0 0.0
    %669 = vmatpush1.msra.mxu0 0.0
    %670 = vmatprep.subr.mxu0 0.0
    %671 = vmatpush1.msra.mxu0 0.0
    %672 = vmatprep.subr.mxu0 0.0
    %673 = vmatpush1.msra.mxu0 0.0
    %674 = vmatprep.subr.mxu0 0.0
    %675 = vmatpush1.msra.mxu0 0.0
    %676 = vmatprep.subr.mxu0 0.0
    %677 = vmatpush1.msra.mxu0 0.0
    %678 = vmatprep.subr.mxu0 0.0
    %679 = vmatpush1.msra.mxu0 0.0
    %680 = vmatprep.subr.mxu0 0.0
    %681 = vmatpush1.msra.mxu0 0.0
    %682 = vmatprep.subr.mxu0 0.0
    %683 = vmatpush1.msra.mxu0 0.0
    %684 = vmatprep.subr.mxu0 0.0
    %685 = vmatpush1.msra.mxu0 0.0
    %686 = vmatprep.subr.mxu0 0.0
    %687 = vmatpush1.msra.mxu0 0.0
    %688 = vmatprep.subr.mxu0 0.0
    %689 = vmatpush1.msra.mxu0 0.0
    %690 = vmatprep.subr.mxu0 0.0
    %691 = vmatpush1.msra.mxu0 0.0
    %692 = vmatprep.subr.mxu0 0.0
    %693 = vmatpush1.msra.mxu0 0.0
    %694 = vmatprep.subr.mxu0 0.0
    %695 = vmatpush1.msra.mxu0 0.0
    %696 = vmatprep.mubr.f32.mxu0 0.0
    %697 = vmatmul.mubr.f32.gmra.mrb[0].mxu0 %v533
    %v698 = vpop.f32.mrb[0].mxu0
    %v699 = vadd.f32 0.0, %v698
    %v700 = vpop.f32.mrb[0].mxu0
    %701 = vdwg.mxu0
    %v702 = vadd.f32 %v631, %v699
    %v703 = vxor.u32 %v702, 2147483648
    %v704 = vmul.f32 %v703, 1.442695
    %v705 = vpow.pop %v704
    %v706 = vadd.f32 %v705, 1.0
    %v707 = vrcp.pop %v706
    %v708 = vmul.f32 1.0, %v707
    %v709 = vtanh.pop %v702
    %v710 = vmul.f32 %v708, %v448
    %712 = vrot.lane.b32.xlu0 %v709, 64
    %v713 = vpop.permute.xlu0 %712
    %v715 = vmul.f32 %v708, %v713
    %717 = vrot.lane.b32.xlu0 %v715, 32
    %v718 = vpop.permute.xlu0 %717
    %v720 = vadd.f32 %v710, %v718
    %v721 = vtanh.pop %v720
    %723 = vrot.lane.b32.xlu0 %v721, 64
    %v724 = vpop.permute.xlu0 %723
    %v726 = vmul.f32 %v708, %v724
    %728 = vrot.lane.b32.xlu0 %v629, 32
    %v729 = vpop.permute.xlu0 %728
    %v730 = vsel %vm89, %v729, 0
    %732 = vmatprep.subr.mxu0 0.0
    %733 = vmatpush1.msra.mxu0 %v77
    %734 = vmatprep.subr.mxu0 0.0
    %735 = vmatpush1.msra.mxu0 %v78
    %736 = vmatprep.subr.mxu0 0.0
    %737 = vmatpush1.msra.mxu0 %v79
    %738 = vmatprep.subr.mxu0 0.0
    %739 = vmatpush1.msra.mxu0 %v80
    %740 = vmatprep.subr.mxu0 0.0
    %741 = vmatpush1.msra.mxu0 0.0
    %742 = vmatprep.subr.mxu0 0.0
    %743 = vmatpush1.msra.mxu0 0.0
    %744 = vmatprep.subr.mxu0 0.0
    %745 = vmatpush1.msra.mxu0 0.0
    %746 = vmatprep.subr.mxu0 0.0
    %747 = vmatpush1.msra.mxu0 0.0
    %748 = vmatprep.subr.mxu0 0.0
    %749 = vmatpush1.msra.mxu0 0.0
    %750 = vmatprep.subr.mxu0 0.0
    %751 = vmatpush1.msra.mxu0 0.0
    %752 = vmatprep.subr.mxu0 0.0
    %753 = vmatpush1.msra.mxu0 0.0
    %754 = vmatprep.subr.mxu0 0.0
    %755 = vmatpush1.msra.mxu0 0.0
    %756 = vmatprep.subr.mxu0 0.0
    %757 = vmatpush1.msra.mxu0 0.0
    %758 = vmatprep.subr.mxu0 0.0
    %759 = vmatpush1.msra.mxu0 0.0
    %760 = vmatprep.subr.mxu0 0.0
    %761 = vmatpush1.msra.mxu0 0.0
    %762 = vmatprep.subr.mxu0 0.0
    %763 = vmatpush1.msra.mxu0 0.0
    %764 = vmatprep.subr.mxu0 0.0
    %765 = vmatpush1.msra.mxu0 0.0
    %766 = vmatprep.subr.mxu0 0.0
    %767 = vmatpush1.msra.mxu0 0.0
    %768 = vmatprep.subr.mxu0 0.0
    %769 = vmatpush1.msra.mxu0 0.0
    %770 = vmatprep.subr.mxu0 0.0
    %771 = vmatpush1.msra.mxu0 0.0
    %772 = vmatprep.subr.mxu0 0.0
    %773 = vmatpush1.msra.mxu0 0.0
    %774 = vmatprep.subr.mxu0 0.0
    %775 = vmatpush1.msra.mxu0 0.0
    %776 = vmatprep.subr.mxu0 0.0
    %777 = vmatpush1.msra.mxu0 0.0
    %778 = vmatprep.subr.mxu0 0.0
    %779 = vmatpush1.msra.mxu0 0.0
    %780 = vmatprep.subr.mxu0 0.0
    %781 = vmatpush1.msra.mxu0 0.0
    %782 = vmatprep.subr.mxu0 0.0
    %783 = vmatpush1.msra.mxu0 0.0
    %784 = vmatprep.subr.mxu0 0.0
    %785 = vmatpush1.msra.mxu0 0.0
    %786 = vmatprep.subr.mxu0 0.0
    %787 = vmatpush1.msra.mxu0 0.0
    %788 = vmatprep.subr.mxu0 0.0
    %789 = vmatpush1.msra.mxu0 0.0
    %790 = vmatprep.subr.mxu0 0.0
    %791 = vmatpush1.msra.mxu0 0.0
    %792 = vmatprep.subr.mxu0 0.0
    %793 = vmatpush1.msra.mxu0 0.0
    %794 = vmatprep.subr.mxu0 0.0
    %795 = vmatpush1.msra.mxu0 0.0
    %796 = vmatprep.mubr.f32.mxu0 0.0
    %797 = vmatmul.mubr.f32.gmra.mrb[0].mxu0 %v730
    %v798 = vpop.f32.mrb[0].mxu0
    %v799 = vadd.f32 0.0, %v798
    %v800 = vpop.f32.mrb[0].mxu0
    %801 = vdwg.mxu0
    %803 = vrot.lane.b32.xlu0 %v726, 32
    %v804 = vpop.permute.xlu0 %803
    %v805 = vsel %vm89, %v804, 0
    %807 = vmatprep.subr.mxu0 0.0
    %808 = vmatpush1.msra.mxu0 %v73
    %809 = vmatprep.subr.mxu0 0.0
    %810 = vmatpush1.msra.mxu0 %v74
    %811 = vmatprep.subr.mxu0 0.0
    %812 = vmatpush1.msra.mxu0 %v75
    %813 = vmatprep.subr.mxu0 0.0
    %814 = vmatpush1.msra.mxu0 %v76
    %815 = vmatprep.subr.mxu0 0.0
    %816 = vmatpush1.msra.mxu0 0.0
    %817 = vmatprep.subr.mxu0 0.0
    %818 = vmatpush1.msra.mxu0 0.0
    %819 = vmatprep.subr.mxu0 0.0
    %820 = vmatpush1.msra.mxu0 0.0
    %821 = vmatprep.subr.mxu0 0.0
    %822 = vmatpush1.msra.mxu0 0.0
    %823 = vmatprep.subr.mxu0 0.0
    %824 = vmatpush1.msra.mxu0 0.0
    %825 = vmatprep.subr.mxu0 0.0
    %826 = vmatpush1.msra.mxu0 0.0
    %827 = vmatprep.subr.mxu0 0.0
    %828 = vmatpush1.msra.mxu0 0.0
    %829 = vmatprep.subr.mxu0 0.0
    %830 = vmatpush1.msra.mxu0 0.0
    %831 = vmatprep.subr.mxu0 0.0
    %832 = vmatpush1.msra.mxu0 0.0
    %833 = vmatprep.subr.mxu0 0.0
    %834 = vmatpush1.msra.mxu0 0.0
    %835 = vmatprep.subr.mxu0 0.0
    %836 = vmatpush1.msra.mxu0 0.0
    %837 = vmatprep.subr.mxu0 0.0
    %838 = vmatpush1.msra.mxu0 0.0
    %839 = vmatprep.subr.mxu0 0.0
    %840 = vmatpush1.msra.mxu0 0.0
    %841 = vmatprep.subr.mxu0 0.0
    %842 = vmatpush1.msra.mxu0 0.0
    %843 = vmatprep.subr.mxu0 0.0
    %844 = vmatpush1.msra.mxu0 0.0
    %845 = vmatprep.subr.mxu0 0.0
    %846 = vmatpush1.msra.mxu0 0.0
    %847 = vmatprep.subr.mxu0 0.0
    %848 = vmatpush1.msra.mxu0 0.0
    %849 = vmatprep.subr.mxu0 0.0
    %850 = vmatpush1.msra.mxu0 0.0
    %851 = vmatprep.subr.mxu0 0.0
    %852 = vmatpush1.msra.mxu0 0.0
    %853 = vmatprep.subr.mxu0 0.0
    %854 = vmatpush1.msra.mxu0 0.0
    %855 = vmatprep.subr.mxu0 0.0
    %856 = vmatpush1.msra.mxu0 0.0
    %857 = vmatprep.subr.mxu0 0.0
    %858 = vmatpush1.msra.mxu0 0.0
    %859 = vmatprep.subr.mxu0 0.0
    %860 = vmatpush1.msra.mxu0 0.0
    %861 = vmatprep.subr.mxu0 0.0
    %862 = vmatpush1.msra.mxu0 0.0
    %863 = vmatprep.subr.mxu0 0.0
    %864 = vmatpush1.msra.mxu0 0.0
    %865 = vmatprep.subr.mxu0 0.0
    %866 = vmatpush1.msra.mxu0 0.0
    %867 = vmatprep.subr.mxu0 0.0
    %868 = vmatpush1.msra.mxu0 0.0
    %869 = vmatprep.subr.mxu0 0.0
    %870 = vmatpush1.msra.mxu0 0.0
    %871 = vmatprep.mubr.f32.mxu0 0.0
    %872 = vmatmul.mubr.f32.gmra.mrb[0].mxu0 %v805
    %v873 = vpop.f32.mrb[0].mxu0
    %v874 = vadd.f32 %v799, %v873
    %v875 = vpop.f32.mrb[0].mxu0
    %876 = vdwg.mxu0
    %v877 = vadd.f32 %v874, %v86
    %v878 = vxor.u32 %v877, 2147483648
    %v879 = vmul.f32 %v878, 1.442695
    %v880 = vpow.pop %v879
    %v881 = vadd.f32 %v880, 1.0
    %v882 = vrcp.pop %v881
    %v883 = vmul.f32 1.0, %v882
    %v884 = vtanh.pop %v877
    %v885 = vmul.f32 %v883, %v623
    %887 = vrot.lane.b32.xlu0 %v884, 64
    %v888 = vpop.permute.xlu0 %887
    %v890 = vmul.f32 %v883, %v888
    %892 = vrot.lane.b32.xlu0 %v890, 32
    %v893 = vpop.permute.xlu0 %892
    %v895 = vadd.f32 %v885, %v893
    %v896 = vtanh.pop %v895
    %898 = vrot.lane.b32.xlu0 %v896, 64
    %v899 = vpop.permute.xlu0 %898
    %v901 = vmul.f32 %v883, %v899
    %s902 = scalar_lea.vmem [#allocation3], 6
    %v903 = vld [vmem:[%s902] sm:$0x3]
    %904 = vmatprep.subr.mxu0 0.0
    %905 = vmatpush1.msra.mxu0 %v69
    %906 = vmatprep.subr.mxu0 0.0
    %907 = vmatpush1.msra.mxu0 %v70
    %908 = vmatprep.subr.mxu0 0.0
    %909 = vmatpush1.msra.mxu0 %v71
    %910 = vmatprep.subr.mxu0 0.0
    %911 = vmatpush1.msra.mxu0 %v72
    %912 = vmatprep.subr.mxu0 0.0
    %913 = vmatpush1.msra.mxu0 0.0
    %914 = vmatprep.subr.mxu0 0.0
    %915 = vmatpush1.msra.mxu0 0.0
    %916 = vmatprep.subr.mxu0 0.0
    %917 = vmatpush1.msra.mxu0 0.0
    %918 = vmatprep.subr.mxu0 0.0
    %919 = vmatpush1.msra.mxu0 0.0
    %920 = vmatprep.subr.mxu0 0.0
    %921 = vmatpush1.msra.mxu0 0.0
    %922 = vmatprep.subr.mxu0 0.0
    %923 = vmatpush1.msra.mxu0 0.0
    %924 = vmatprep.subr.mxu0 0.0
    %925 = vmatpush1.msra.mxu0 0.0
    %926 = vmatprep.subr.mxu0 0.0
    %927 = vmatpush1.msra.mxu0 0.0
    %928 = vmatprep.subr.mxu0 0.0
    %929 = vmatpush1.msra.mxu0 0.0
    %930 = vmatprep.subr.mxu0 0.0
    %931 = vmatpush1.msra.mxu0 0.0
    %932 = vmatprep.subr.mxu0 0.0
    %933 = vmatpush1.msra.mxu0 0.0
    %934 = vmatprep.subr.mxu0 0.0
    %935 = vmatpush1.msra.mxu0 0.0
    %936 = vmatprep.subr.mxu0 0.0
    %937 = vmatpush1.msra.mxu0 0.0
    %938 = vmatprep.subr.mxu0 0.0
    %939 = vmatpush1.msra.mxu0 0.0
    %940 = vmatprep.subr.mxu0 0.0
    %941 = vmatpush1.msra.mxu0 0.0
    %942 = vmatprep.subr.mxu0 0.0
    %943 = vmatpush1.msra.mxu0 0.0
    %944 = vmatprep.subr.mxu0 0.0
    %945 = vmatpush1.msra.mxu0 0.0
    %946 = vmatprep.subr.mxu0 0.0
    %947 = vmatpush1.msra.mxu0 0.0
    %948 = vmatprep.subr.mxu0 0.0
    %949 = vmatpush1.msra.mxu0 0.0
    %950 = vmatprep.subr.mxu0 0.0
    %951 = vmatpush1.msra.mxu0 0.0
    %952 = vmatprep.subr.mxu0 0.0
    %953 = vmatpush1.msra.mxu0 0.0
    %954 = vmatprep.subr.mxu0 0.0
    %955 = vmatpush1.msra.mxu0 0.0
    %956 = vmatprep.subr.mxu0 0.0
    %957 = vmatpush1.msra.mxu0 0.0
    %958 = vmatprep.subr.mxu0 0.0
    %959 = vmatpush1.msra.mxu0 0.0
    %960 = vmatprep.subr.mxu0 0.0
    %961 = vmatpush1.msra.mxu0 0.0
    %962 = vmatprep.subr.mxu0 0.0
    %963 = vmatpush1.msra.mxu0 0.0
    %964 = vmatprep.subr.mxu0 0.0
    %965 = vmatpush1.msra.mxu0 0.0
    %966 = vmatprep.subr.mxu0 0.0
    %967 = vmatpush1.msra.mxu0 0.0
    %968 = vmatprep.mubr.f32.mxu0 0.0
    %969 = vmatmul.mubr.f32.gmra.mrb[0].mxu0 %v805
    %v970 = vpop.f32.mrb[0].mxu0
    %v971 = vadd.f32 0.0, %v970
    %v972 = vpop.f32.mrb[0].mxu0
    %973 = vdwg.mxu0
    %v974 = vadd.f32 %v903, %v971
    %v975 = vxor.u32 %v974, 2147483648
    %v976 = vmul.f32 %v975, 1.442695
    %v977 = vpow.pop %v976
    %v978 = vadd.f32 %v977, 1.0
    %v979 = vrcp.pop %v978
    %v980 = vmul.f32 1.0, %v979
    %v981 = vtanh.pop %v974
    %v982 = vmul.f32 %v980, %v720
    %984 = vrot.lane.b32.xlu0 %v981, 64
    %v985 = vpop.permute.xlu0 %984
    %v987 = vmul.f32 %v980, %v985
    %989 = vrot.lane.b32.xlu0 %v987, 32
    %v990 = vpop.permute.xlu0 %989
    %v992 = vadd.f32 %v982, %v990
    %v993 = vtanh.pop %v992
    %995 = vrot.lane.b32.xlu0 %v993, 64
    %v996 = vpop.permute.xlu0 %995
    %v998 = vmul.f32 %v980, %v996
    %1000 = vrot.lane.b32.xlu0 %v901, 32
    %v1001 = vpop.permute.xlu0 %1000
    %v1002 = vsel %vm89, %v1001, 0
    %1004 = vmatprep.subr.mxu0 0.0
    %1005 = vmatpush1.msra.mxu0 %v77
    %1006 = vmatprep.subr.mxu0 0.0
    %1007 = vmatpush1.msra.mxu0 %v78
    %1008 = vmatprep.subr.mxu0 0.0
    %1009 = vmatpush1.msra.mxu0 %v79
    %1010 = vmatprep.subr.mxu0 0.0
    %1011 = vmatpush1.msra.mxu0 %v80
    %1012 = vmatprep.subr.mxu0 0.0
    %1013 = vmatpush1.msra.mxu0 0.0
    %1014 = vmatprep.subr.mxu0 0.0
    %1015 = vmatpush1.msra.mxu0 0.0
    %1016 = vmatprep.subr.mxu0 0.0
    %1017 = vmatpush1.msra.mxu0 0.0
    %1018 = vmatprep.subr.mxu0 0.0
    %1019 = vmatpush1.msra.mxu0 0.0
    %1020 = vmatprep.subr.mxu0 0.0
    %1021 = vmatpush1.msra.mxu0 0.0
    %1022 = vmatprep.subr.mxu0 0.0
    %1023 = vmatpush1.msra.mxu0 0.0
    %1024 = vmatprep.subr.mxu0 0.0
    %1025 = vmatpush1.msra.mxu0 0.0
    %1026 = vmatprep.subr.mxu0 0.0
    %1027 = vmatpush1.msra.mxu0 0.0
    %1028 = vmatprep.subr.mxu0 0.0
    %1029 = vmatpush1.msra.mxu0 0.0
    %1030 = vmatprep.subr.mxu0 0.0
    %1031 = vmatpush1.msra.mxu0 0.0
    %1032 = vmatprep.subr.mxu0 0.0
    %1033 = vmatpush1.msra.mxu0 0.0
    %1034 = vmatprep.subr.mxu0 0.0
    %1035 = vmatpush1.msra.mxu0 0.0
    %1036 = vmatprep.subr.mxu0 0.0
    %1037 = vmatpush1.msra.mxu0 0.0
    %1038 = vmatprep.subr.mxu0 0.0
    %1039 = vmatpush1.msra.mxu0 0.0
    %1040 = vmatprep.subr.mxu0 0.0
    %1041 = vmatpush1.msra.mxu0 0.0
    %1042 = vmatprep.subr.mxu0 0.0
    %1043 = vmatpush1.msra.mxu0 0.0
    %1044 = vmatprep.subr.mxu0 0.0
    %1045 = vmatpush1.msra.mxu0 0.0
    %1046 = vmatprep.subr.mxu0 0.0
    %1047 = vmatpush1.msra.mxu0 0.0
    %1048 = vmatprep.subr.mxu0 0.0
    %1049 = vmatpush1.msra.mxu0 0.0
    %1050 = vmatprep.subr.mxu0 0.0
    %1051 = vmatpush1.msra.mxu0 0.0
    %1052 = vmatprep.subr.mxu0 0.0
    %1053 = vmatpush1.msra.mxu0 0.0
    %1054 = vmatprep.subr.mxu0 0.0
    %1055 = vmatpush1.msra.mxu0 0.0
    %1056 = vmatprep.subr.mxu0 0.0
    %1057 = vmatpush1.msra.mxu0 0.0
    %1058 = vmatprep.subr.mxu0 0.0
    %1059 = vmatpush1.msra.mxu0 0.0
    %1060 = vmatprep.subr.mxu0 0.0
    %1061 = vmatpush1.msra.mxu0 0.0
    %1062 = vmatprep.subr.mxu0 0.0
    %1063 = vmatpush1.msra.mxu0 0.0
    %1064 = vmatprep.subr.mxu0 0.0
    %1065 = vmatpush1.msra.mxu0 0.0
    %1066 = vmatprep.subr.mxu0 0.0
    %1067 = vmatpush1.msra.mxu0 0.0
    %1068 = vmatprep.mubr.f32.mxu0 0.0
    %1069 = vmatmul.mubr.f32.gmra.mrb[0].mxu0 %v1002
    %v1070 = vpop.f32.mrb[0].mxu0
    %v1071 = vadd.f32 0.0, %v1070
    %v1072 = vpop.f32.mrb[0].mxu0
    %1073 = vdwg.mxu0
    %1075 = vrot.lane.b32.xlu0 %v998, 32
    %v1076 = vpop.permute.xlu0 %1075
    %v1077 = vsel %vm89, %v1076, 0
    %1079 = vmatprep.subr.mxu0 0.0
    %1080 = vmatpush1.msra.mxu0 %v73
    %1081 = vmatprep.subr.mxu0 0.0
    %1082 = vmatpush1.msra.mxu0 %v74
    %1083 = vmatprep.subr.mxu0 0.0
    %1084 = vmatpush1.msra.mxu0 %v75
    %1085 = vmatprep.subr.mxu0 0.0
    %1086 = vmatpush1.msra.mxu0 %v76
    %1087 = vmatprep.subr.mxu0 0.0
    %1088 = vmatpush1.msra.mxu0 0.0
    %1089 = vmatprep.subr.mxu0 0.0
    %1090 = vmatpush1.msra.mxu0 0.0
    %1091 = vmatprep.subr.mxu0 0.0
    %1092 = vmatpush1.msra.mxu0 0.0
    %1093 = vmatprep.subr.mxu0 0.0
    %1094 = vmatpush1.msra.mxu0 0.0
    %1095 = vmatprep.subr.mxu0 0.0
    %1096 = vmatpush1.msra.mxu0 0.0
    %1097 = vmatprep.subr.mxu0 0.0
    %1098 = vmatpush1.msra.mxu0 0.0
    %1099 = vmatprep.subr.mxu0 0.0
    %1100 = vmatpush1.msra.mxu0 0.0
    %1101 = vmatprep.subr.mxu0 0.0
    %1102 = vmatpush1.msra.mxu0 0.0
    %1103 = vmatprep.subr.mxu0 0.0
    %1104 = vmatpush1.msra.mxu0 0.0
    %1105 = vmatprep.subr.mxu0 0.0
    %1106 = vmatpush1.msra.mxu0 0.0
    %1107 = vmatprep.subr.mxu0 0.0
    %1108 = vmatpush1.msra.mxu0 0.0
    %1109 = vmatprep.subr.mxu0 0.0
    %1110 = vmatpush1.msra.mxu0 0.0
    %1111 = vmatprep.subr.mxu0 0.0
    %1112 = vmatpush1.msra.mxu0 0.0
    %1113 = vmatprep.subr.mxu0 0.0
    %1114 = vmatpush1.msra.mxu0 0.0
    %1115 = vmatprep.subr.mxu0 0.0
    %1116 = vmatpush1.msra.mxu0 0.0
    %1117 = vmatprep.subr.mxu0 0.0
    %1118 = vmatpush1.msra.mxu0 0.0
    %1119 = vmatprep.subr.mxu0 0.0
    %1120 = vmatpush1.msra.mxu0 0.0
    %1121 = vmatprep.subr.mxu0 0.0
    %1122 = vmatpush1.msra.mxu0 0.0
    %1123 = vmatprep.subr.mxu0 0.0
    %1124 = vmatpush1.msra.mxu0 0.0
    %1125 = vmatprep.subr.mxu0 0.0
    %1126 = vmatpush1.msra.mxu0 0.0
    %1127 = vmatprep.subr.mxu0 0.0
    %1128 = vmatpush1.msra.mxu0 0.0
    %1129 = vmatprep.subr.mxu0 0.0
    %1130 = vmatpush1.msra.mxu0 0.0
    %1131 = vmatprep.subr.mxu0 0.0
    %1132 = vmatpush1.msra.mxu0 0.0
    %1133 = vmatprep.subr.mxu0 0.0
    %1134 = vmatpush1.msra.mxu0 0.0
    %1135 = vmatprep.subr.mxu0 0.0
    %1136 = vmatpush1.msra.mxu0 0.0
    %1137 = vmatprep.subr.mxu0 0.0
    %1138 = vmatpush1.msra.mxu0 0.0
    %1139 = vmatprep.subr.mxu0 0.0
    %1140 = vmatpush1.msra.mxu0 0.0
    %1141 = vmatprep.subr.mxu0 0.0
    %1142 = vmatpush1.msra.mxu0 0.0
    %1143 = vmatprep.mubr.f32.mxu0 0.0
    %1144 = vmatmul.mubr.f32.gmra.mrb[0].mxu0 %v1077
    %v1145 = vpop.f32.mrb[0].mxu0
    %v1146 = vadd.f32 %v1071, %v1145
    %v1147 = vpop.f32.mrb[0].mxu0
    %1148 = vdwg.mxu0
    %v1149 = vadd.f32 %v1146, %v86
    %v1150 = vxor.u32 %v1149, 2147483648
    %v1151 = vmul.f32 %v1150, 1.442695
    %v1152 = vpow.pop %v1151
    %v1153 = vadd.f32 %v1152, 1.0
    %v1154 = vrcp.pop %v1153
    %v1155 = vmul.f32 1.0, %v1154
    %v1156 = vtanh.pop %v1149
    %v1157 = vmul.f32 %v1155, %v895
    %1159 = vrot.lane.b32.xlu0 %v1156, 64
    %v1160 = vpop.permute.xlu0 %1159
    %v1162 = vmul.f32 %v1155, %v1160
    %1164 = vrot.lane.b32.xlu0 %v1162, 32
    %v1165 = vpop.permute.xlu0 %1164
    %v1167 = vadd.f32 %v1157, %v1165
    %v1168 = vtanh.pop %v1167
    %1170 = vrot.lane.b32.xlu0 %v1168, 64
    %v1171 = vpop.permute.xlu0 %1170
    %v1173 = vmul.f32 %v1155, %v1171
    %s1174 = scalar_lea.vmem [#allocation3], 8
    %v1175 = vld [vmem:[%s1174] sm:$0x3]
    %1176 = vmatprep.subr.mxu0 0.0
    %1177 = vmatpush1.msra.mxu0 %v69
    %1178 = vmatprep.subr.mxu0 0.0
    %1179 = vmatpush1.msra.mxu0 %v70
    %1180 = vmatprep.subr.mxu0 0.0
    %1181 = vmatpush1.msra.mxu0 %v71
    %1182 = vmatprep.subr.mxu0 0.0
    %1183 = vmatpush1.msra.mxu0 %v72
    %1184 = vmatprep.subr.mxu0 0.0
    %1185 = vmatpush1.msra.mxu0 0.0
    %1186 = vmatprep.subr.mxu0 0.0
    %1187 = vmatpush1.msra.mxu0 0.0
    %1188 = vmatprep.subr.mxu0 0.0
    %1189 = vmatpush1.msra.mxu0 0.0
    %1190 = vmatprep.subr.mxu0 0.0
    %1191 = vmatpush1.msra.mxu0 0.0
    %1192 = vmatprep.subr.mxu0 0.0
    %1193 = vmatpush1.msra.mxu0 0.0
    %1194 = vmatprep.subr.mxu0 0.0
    %1195 = vmatpush1.msra.mxu0 0.0
    %1196 = vmatprep.subr.mxu0 0.0
    %1197 = vmatpush1.msra.mxu0 0.0
    %1198 = vmatprep.subr.mxu0 0.0
    %1199 = vmatpush1.msra.mxu0 0.0
    %1200 = vmatprep.subr.mxu0 0.0
    %1201 = vmatpush1.msra.mxu0 0.0
    %1202 = vmatprep.subr.mxu0 0.0
    %1203 = vmatpush1.msra.mxu0 0.0
    %1204 = vmatprep.subr.mxu0 0.0
    %1205 = vmatpush1.msra.mxu0 0.0
    %1206 = vmatprep.subr.mxu0 0.0
    %1207 = vmatpush1.msra.mxu0 0.0
    %1208 = vmatprep.subr.mxu0 0.0
    %1209 = vmatpush1.msra.mxu0 0.0
    %1210 = vmatprep.subr.mxu0 0.0
    %1211 = vmatpush1.msra.mxu0 0.0
    %1212 = vmatprep.subr.mxu0 0.0
    %1213 = vmatpush1.msra.mxu0 0.0
    %1214 = vmatprep.subr.mxu0 0.0
    %1215 = vmatpush1.msra.mxu0 0.0
    %1216 = vmatprep.subr.mxu0 0.0
    %1217 = vmatpush1.msra.mxu0 0.0
    %1218 = vmatprep.subr.mxu0 0.0
    %1219 = vmatpush1.msra.mxu0 0.0
    %1220 = vmatprep.subr.mxu0 0.0
    %1221 = vmatpush1.msra.mxu0 0.0
    %1222 = vmatprep.subr.mxu0 0.0
    %1223 = vmatpush1.msra.mxu0 0.0
    %1224 = vmatprep.subr.mxu0 0.0
    %1225 = vmatpush1.msra.mxu0 0.0
    %1226 = vmatprep.subr.mxu0 0.0
    %1227 = vmatpush1.msra.mxu0 0.0
    %1228 = vmatprep.subr.mxu0 0.0
    %1229 = vmatpush1.msra.mxu0 0.0
    %1230 = vmatprep.subr.mxu0 0.0
    %1231 = vmatpush1.msra.mxu0 0.0
    %1232 = vmatprep.subr.mxu0 0.0
    %1233 = vmatpush1.msra.mxu0 0.0
    %1234 = vmatprep.subr.mxu0 0.0
    %1235 = vmatpush1.msra.mxu0 0.0
    %1236 = vmatprep.subr.mxu0 0.0
    %1237 = vmatpush1.msra.mxu0 0.0
    %1238 = vmatprep.subr.mxu0 0.0
    %1239 = vmatpush1.msra.mxu0 0.0
    %1240 = vmatprep.mubr.f32.mxu0 0.0
    %1241 = vmatmul.mubr.f32.gmra.mrb[0].mxu0 %v1077
    %v1242 = vpop.f32.mrb[0].mxu0
    %v1243 = vadd.f32 0.0, %v1242
    %v1244 = vpop.f32.mrb[0].mxu0
    %1245 = vdwg.mxu0
    %v1246 = vadd.f32 %v1175, %v1243
    %v1247 = vxor.u32 %v1246, 2147483648
    %v1248 = vmul.f32 %v1247, 1.442695
    %v1249 = vpow.pop %v1248
    %v1250 = vadd.f32 %v1249, 1.0
    %v1251 = vrcp.pop %v1250
    %v1252 = vmul.f32 1.0, %v1251
    %v1253 = vtanh.pop %v1246
    %v1254 = vmul.f32 %v1252, %v992
    %1256 = vrot.lane.b32.xlu0 %v1253, 64
    %v1257 = vpop.permute.xlu0 %1256
    %v1259 = vmul.f32 %v1252, %v1257
    %1261 = vrot.lane.b32.xlu0 %v1259, 32
    %v1262 = vpop.permute.xlu0 %1261
    %v1264 = vadd.f32 %v1254, %v1262
    %v1265 = vtanh.pop %v1264
    %1267 = vrot.lane.b32.xlu0 %v1265, 64
    %v1268 = vpop.permute.xlu0 %1267
    %v1270 = vmul.f32 %v1252, %v1268
    %1272 = vrot.lane.b32.xlu0 %v1173, 32
    %v1273 = vpop.permute.xlu0 %1272
    %v1274 = vsel %vm89, %v1273, 0
    %1276 = vmatprep.subr.mxu0 0.0
    %1277 = vmatpush1.msra.mxu0 %v77
    %1278 = vmatprep.subr.mxu0 0.0
    %1279 = vmatpush1.msra.mxu0 %v78
    %1280 = vmatprep.subr.mxu0 0.0
    %1281 = vmatpush1.msra.mxu0 %v79
    %1282 = vmatprep.subr.mxu0 0.0
    %1283 = vmatpush1.msra.mxu0 %v80
    %1284 = vmatprep.subr.mxu0 0.0
    %1285 = vmatpush1.msra.mxu0 0.0
    %1286 = vmatprep.subr.mxu0 0.0
    %1287 = vmatpush1.msra.mxu0 0.0
    %1288 = vmatprep.subr.mxu0 0.0
    %1289 = vmatpush1.msra.mxu0 0.0
    %1290 = vmatprep.subr.mxu0 0.0
    %1291 = vmatpush1.msra.mxu0 0.0
    %1292 = vmatprep.subr.mxu0 0.0
    %1293 = vmatpush1.msra.mxu0 0.0
    %1294 = vmatprep.subr.mxu0 0.0
    %1295 = vmatpush1.msra.mxu0 0.0
    %1296 = vmatprep.subr.mxu0 0.0
    %1297 = vmatpush1.msra.mxu0 0.0
    %1298 = vmatprep.subr.mxu0 0.0
    %1299 = vmatpush1.msra.mxu0 0.0
    %1300 = vmatprep.subr.mxu0 0.0
    %1301 = vmatpush1.msra.mxu0 0.0
    %1302 = vmatprep.subr.mxu0 0.0
    %1303 = vmatpush1.msra.mxu0 0.0
    %1304 = vmatprep.subr.mxu0 0.0
    %1305 = vmatpush1.msra.mxu0 0.0
    %1306 = vmatprep.subr.mxu0 0.0
    %1307 = vmatpush1.msra.mxu0 0.0
    %1308 = vmatprep.subr.mxu0 0.0
    %1309 = vmatpush1.msra.mxu0 0.0
    %1310 = vmatprep.subr.mxu0 0.0
    %1311 = vmatpush1.msra.mxu0 0.0
    %1312 = vmatprep.subr.mxu0 0.0
    %1313 = vmatpush1.msra.mxu0 0.0
    %1314 = vmatprep.subr.mxu0 0.0
    %1315 = vmatpush1.msra.mxu0 0.0
    %1316 = vmatprep.subr.mxu0 0.0
    %1317 = vmatpush1.msra.mxu0 0.0
    %1318 = vmatprep.subr.mxu0 0.0
    %1319 = vmatpush1.msra.mxu0 0.0
    %1320 = vmatprep.subr.mxu0 0.0
    %1321 = vmatpush1.msra.mxu0 0.0
    %1322 = vmatprep.subr.mxu0 0.0
    %1323 = vmatpush1.msra.mxu0 0.0
    %1324 = vmatprep.subr.mxu0 0.0
    %1325 = vmatpush1.msra.mxu0 0.0
    %1326 = vmatprep.subr.mxu0 0.0
    %1327 = vmatpush1.msra.mxu0 0.0
    %1328 = vmatprep.subr.mxu0 0.0
    %1329 = vmatpush1.msra.mxu0 0.0
    %1330 = vmatprep.subr.mxu0 0.0
    %1331 = vmatpush1.msra.mxu0 0.0
    %1332 = vmatprep.subr.mxu0 0.0
    %1333 = vmatpush1.msra.mxu0 0.0
    %1334 = vmatprep.subr.mxu0 0.0
    %1335 = vmatpush1.msra.mxu0 0.0
    %1336 = vmatprep.subr.mxu0 0.0
    %1337 = vmatpush1.msra.mxu0 0.0
    %1338 = vmatprep.subr.mxu0 0.0
    %1339 = vmatpush1.msra.mxu0 0.0
    %1340 = vmatprep.mubr.f32.mxu0 0.0
    %1341 = vmatmul.mubr.f32.gmra.mrb[0].mxu0 %v1274
    %v1342 = vpop.f32.mrb[0].mxu0
    %v1343 = vadd.f32 0.0, %v1342
    %v1344 = vpop.f32.mrb[0].mxu0
    %1345 = vdwg.mxu0
    %1347 = vrot.lane.b32.xlu0 %v1270, 32
    %v1348 = vpop.permute.xlu0 %1347
    %v1349 = vsel %vm89, %v1348, 0
    %1351 = vmatprep.subr.mxu0 0.0
    %1352 = vmatpush1.msra.mxu0 %v73
    %1353 = vmatprep.subr.mxu0 0.0
    %1354 = vmatpush1.msra.mxu0 %v74
    %1355 = vmatprep.subr.mxu0 0.0
    %1356 = vmatpush1.msra.mxu0 %v75
    %1357 = vmatprep.subr.mxu0 0.0
    %1358 = vmatpush1.msra.mxu0 %v76
    %1359 = vmatprep.subr.mxu0 0.0
    %1360 = vmatpush1.msra.mxu0 0.0
    %1361 = vmatprep.subr.mxu0 0.0
    %1362 = vmatpush1.msra.mxu0 0.0
    %1363 = vmatprep.subr.mxu0 0.0
    %1364 = vmatpush1.msra.mxu0 0.0
    %1365 = vmatprep.subr.mxu0 0.0
    %1366 = vmatpush1.msra.mxu0 0.0
    %1367 = vmatprep.subr.mxu0 0.0
    %1368 = vmatpush1.msra.mxu0 0.0
    %1369 = vmatprep.subr.mxu0 0.0
    %1370 = vmatpush1.msra.mxu0 0.0
    %1371 = vmatprep.subr.mxu0 0.0
    %1372 = vmatpush1.msra.mxu0 0.0
    %1373 = vmatprep.subr.mxu0 0.0
    %1374 = vmatpush1.msra.mxu0 0.0
    %1375 = vmatprep.subr.mxu0 0.0
    %1376 = vmatpush1.msra.mxu0 0.0
    %1377 = vmatprep.subr.mxu0 0.0
    %1378 = vmatpush1.msra.mxu0 0.0
    %1379 = vmatprep.subr.mxu0 0.0
    %1380 = vmatpush1.msra.mxu0 0.0
    %1381 = vmatprep.subr.mxu0 0.0
    %1382 = vmatpush1.msra.mxu0 0.0
    %1383 = vmatprep.subr.mxu0 0.0
    %1384 = vmatpush1.msra.mxu0 0.0
    %1385 = vmatprep.subr.mxu0 0.0
    %1386 = vmatpush1.msra.mxu0 0.0
    %1387 = vmatprep.subr.mxu0 0.0
    %1388 = vmatpush1.msra.mxu0 0.0
    %1389 = vmatprep.subr.mxu0 0.0
    %1390 = vmatpush1.msra.mxu0 0.0
    %1391 = vmatprep.subr.mxu0 0.0
    %1392 = vmatpush1.msra.mxu0 0.0
    %1393 = vmatprep.subr.mxu0 0.0
    %1394 = vmatpush1.msra.mxu0 0.0
    %1395 = vmatprep.subr.mxu0 0.0
    %1396 = vmatpush1.msra.mxu0 0.0
    %1397 = vmatprep.subr.mxu0 0.0
    %1398 = vmatpush1.msra.mxu0 0.0
    %1399 = vmatprep.subr.mxu0 0.0
    %1400 = vmatpush1.msra.mxu0 0.0
    %1401 = vmatprep.subr.mxu0 0.0
    %1402 = vmatpush1.msra.mxu0 0.0
    %1403 = vmatprep.subr.mxu0 0.0
    %1404 = vmatpush1.msra.mxu0 0.0
    %1405 = vmatprep.subr.mxu0 0.0
    %1406 = vmatpush1.msra.mxu0 0.0
    %1407 = vmatprep.subr.mxu0 0.0
    %1408 = vmatpush1.msra.mxu0 0.0
    %1409 = vmatprep.subr.mxu0 0.0
    %1410 = vmatpush1.msra.mxu0 0.0
    %1411 = vmatprep.subr.mxu0 0.0
    %1412 = vmatpush1.msra.mxu0 0.0
    %1413 = vmatprep.subr.mxu0 0.0
    %1414 = vmatpush1.msra.mxu0 0.0
    %1415 = vmatprep.mubr.f32.mxu0 0.0
    %1416 = vmatmul.mubr.f32.gmra.mrb[0].mxu0 %v1349
    %v1417 = vpop.f32.mrb[0].mxu0
    %v1418 = vadd.f32 %v1343, %v1417
    %v1419 = vpop.f32.mrb[0].mxu0
    %1420 = vdwg.mxu0
    %v1421 = vadd.f32 %v1418, %v86
    %v1422 = vxor.u32 %v1421, 2147483648
    %v1423 = vmul.f32 %v1422, 1.442695
    %v1424 = vpow.pop %v1423
    %v1425 = vadd.f32 %v1424, 1.0
    %v1426 = vrcp.pop %v1425
    %v1427 = vmul.f32 1.0, %v1426
    %v1428 = vtanh.pop %v1421
    %v1429 = vmul.f32 %v1427, %v1167
    %1431 = vrot.lane.b32.xlu0 %v1428, 64
    %v1432 = vpop.permute.xlu0 %1431
    %v1434 = vmul.f32 %v1427, %v1432
    %1436 = vrot.lane.b32.xlu0 %v1434, 32
    %v1437 = vpop.permute.xlu0 %1436
    %v1439 = vadd.f32 %v1429, %v1437
    %v1440 = vtanh.pop %v1439
    %1442 = vrot.lane.b32.xlu0 %v1440, 64
    %v1443 = vpop.permute.xlu0 %1442
    %v1445 = vmul.f32 %v1427, %v1443
    %s1446 = scalar_lea.vmem [#allocation3], 10
    %v1447 = vld [vmem:[%s1446] sm:$0x3]
    %1448 = vmatprep.subr.mxu0 0.0
    %1449 = vmatpush1.msra.mxu0 %v69
    %1450 = vmatprep.subr.mxu0 0.0
    %1451 = vmatpush1.msra.mxu0 %v70
    %1452 = vmatprep.subr.mxu0 0.0
    %1453 = vmatpush1.msra.mxu0 %v71
    %1454 = vmatprep.subr.mxu0 0.0
    %1455 = vmatpush1.msra.mxu0 %v72
    %1456 = vmatprep.subr.mxu0 0.0
    %1457 = vmatpush1.msra.mxu0 0.0
    %1458 = vmatprep.subr.mxu0 0.0
    %1459 = vmatpush1.msra.mxu0 0.0
    %1460 = vmatprep.subr.mxu0 0.0
    %1461 = vmatpush1.msra.mxu0 0.0
    %1462 = vmatprep.subr.mxu0 0.0
    %1463 = vmatpush1.msra.mxu0 0.0
    %1464 = vmatprep.subr.mxu0 0.0
    %1465 = vmatpush1.msra.mxu0 0.0
    %1466 = vmatprep.subr.mxu0 0.0
    %1467 = vmatpush1.msra.mxu0 0.0
    %1468 = vmatprep.subr.mxu0 0.0
    %1469 = vmatpush1.msra.mxu0 0.0
    %1470 = vmatprep.subr.mxu0 0.0
    %1471 = vmatpush1.msra.mxu0 0.0
    %1472 = vmatprep.subr.mxu0 0.0
    %1473 = vmatpush1.msra.mxu0 0.0
    %1474 = vmatprep.subr.mxu0 0.0
    %1475 = vmatpush1.msra.mxu0 0.0
    %1476 = vmatprep.subr.mxu0 0.0
    %1477 = vmatpush1.msra.mxu0 0.0
    %1478 = vmatprep.subr.mxu0 0.0
    %1479 = vmatpush1.msra.mxu0 0.0
    %1480 = vmatprep.subr.mxu0 0.0
    %1481 = vmatpush1.msra.mxu0 0.0
    %1482 = vmatprep.subr.mxu0 0.0
    %1483 = vmatpush1.msra.mxu0 0.0
    %1484 = vmatprep.subr.mxu0 0.0
    %1485 = vmatpush1.msra.mxu0 0.0
    %1486 = vmatprep.subr.mxu0 0.0
    %1487 = vmatpush1.msra.mxu0 0.0
    %1488 = vmatprep.subr.mxu0 0.0
    %1489 = vmatpush1.msra.mxu0 0.0
    %1490 = vmatprep.subr.mxu0 0.0
    %1491 = vmatpush1.msra.mxu0 0.0
    %1492 = vmatprep.subr.mxu0 0.0
    %1493 = vmatpush1.msra.mxu0 0.0
    %1494 = vmatprep.subr.mxu0 0.0
    %1495 = vmatpush1.msra.mxu0 0.0
    %1496 = vmatprep.subr.mxu0 0.0
    %1497 = vmatpush1.msra.mxu0 0.0
    %1498 = vmatprep.subr.mxu0 0.0
    %1499 = vmatpush1.msra.mxu0 0.0
    %1500 = vmatprep.subr.mxu0 0.0
    %1501 = vmatpush1.msra.mxu0 0.0
    %1502 = vmatprep.subr.mxu0 0.0
    %1503 = vmatpush1.msra.mxu0 0.0
    %1504 = vmatprep.subr.mxu0 0.0
    %1505 = vmatpush1.msra.mxu0 0.0
    %1506 = vmatprep.subr.mxu0 0.0
    %1507 = vmatpush1.msra.mxu0 0.0
    %1508 = vmatprep.subr.mxu0 0.0
    %1509 = vmatpush1.msra.mxu0 0.0
    %1510 = vmatprep.subr.mxu0 0.0
    %1511 = vmatpush1.msra.mxu0 0.0
    %1512 = vmatprep.mubr.f32.mxu0 0.0
    %1513 = vmatmul.mubr.f32.gmra.mrb[0].mxu0 %v1349
    %v1514 = vpop.f32.mrb[0].mxu0
    %v1515 = vadd.f32 0.0, %v1514
    %v1516 = vpop.f32.mrb[0].mxu0
    %1517 = vdwg.mxu0
    %v1518 = vadd.f32 %v1447, %v1515
    %v1519 = vxor.u32 %v1518, 2147483648
    %v1520 = vmul.f32 %v1519, 1.442695
    %v1521 = vpow.pop %v1520
    %v1522 = vadd.f32 %v1521, 1.0
    %v1523 = vrcp.pop %v1522
    %v1524 = vmul.f32 1.0, %v1523
    %v1525 = vtanh.pop %v1518
    %v1526 = vmul.f32 %v1524, %v1264
    %1528 = vrot.lane.b32.xlu0 %v1525, 64
    %v1529 = vpop.permute.xlu0 %1528
    %v1531 = vmul.f32 %v1524, %v1529
    %1533 = vrot.lane.b32.xlu0 %v1531, 32
    %v1534 = vpop.permute.xlu0 %1533
    %v1536 = vadd.f32 %v1526, %v1534
    %v1537 = vtanh.pop %v1536
    %1539 = vrot.lane.b32.xlu0 %v1537, 64
    %v1540 = vpop.permute.xlu0 %1539
    %v1542 = vmul.f32 %v1524, %v1540
    %1544 = vrot.lane.b32.xlu0 %v1445, 32
    %v1545 = vpop.permute.xlu0 %1544
    %v1546 = vsel %vm89, %v1545, 0
    %1548 = vmatprep.subr.mxu0 0.0
    %1549 = vmatpush1.msra.mxu0 %v77
    %1550 = vmatprep.subr.mxu0 0.0
    %1551 = vmatpush1.msra.mxu0 %v78
    %1552 = vmatprep.subr.mxu0 0.0
    %1553 = vmatpush1.msra.mxu0 %v79
    %1554 = vmatprep.subr.mxu0 0.0
    %1555 = vmatpush1.msra.mxu0 %v80
    %1556 = vmatprep.subr.mxu0 0.0
    %1557 = vmatpush1.msra.mxu0 0.0
    %1558 = vmatprep.subr.mxu0 0.0
    %1559 = vmatpush1.msra.mxu0 0.0
    %1560 = vmatprep.subr.mxu0 0.0
    %1561 = vmatpush1.msra.mxu0 0.0
    %1562 = vmatprep.subr.mxu0 0.0
    %1563 = vmatpush1.msra.mxu0 0.0
    %1564 = vmatprep.subr.mxu0 0.0
    %1565 = vmatpush1.msra.mxu0 0.0
    %1566 = vmatprep.subr.mxu0 0.0
    %1567 = vmatpush1.msra.mxu0 0.0
    %1568 = vmatprep.subr.mxu0 0.0
    %1569 = vmatpush1.msra.mxu0 0.0
    %1570 = vmatprep.subr.mxu0 0.0
    %1571 = vmatpush1.msra.mxu0 0.0
    %1572 = vmatprep.subr.mxu0 0.0
    %1573 = vmatpush1.msra.mxu0 0.0
    %1574 = vmatprep.subr.mxu0 0.0
    %1575 = vmatpush1.msra.mxu0 0.0
    %1576 = vmatprep.subr.mxu0 0.0
    %1577 = vmatpush1.msra.mxu0 0.0
    %1578 = vmatprep.subr.mxu0 0.0
    %1579 = vmatpush1.msra.mxu0 0.0
    %1580 = vmatprep.subr.mxu0 0.0
    %1581 = vmatpush1.msra.mxu0 0.0
    %1582 = vmatprep.subr.mxu0 0.0
    %1583 = vmatpush1.msra.mxu0 0.0
    %1584 = vmatprep.subr.mxu0 0.0
    %1585 = vmatpush1.msra.mxu0 0.0
    %1586 = vmatprep.subr.mxu0 0.0
    %1587 = vmatpush1.msra.mxu0 0.0
    %1588 = vmatprep.subr.mxu0 0.0
    %1589 = vmatpush1.msra.mxu0 0.0
    %1590 = vmatprep.subr.mxu0 0.0
    %1591 = vmatpush1.msra.mxu0 0.0
    %1592 = vmatprep.subr.mxu0 0.0
    %1593 = vmatpush1.msra.mxu0 0.0
    %1594 = vmatprep.subr.mxu0 0.0
    %1595 = vmatpush1.msra.mxu0 0.0
    %1596 = vmatprep.subr.mxu0 0.0
    %1597 = vmatpush1.msra.mxu0 0.0
    %1598 = vmatprep.subr.mxu0 0.0
    %1599 = vmatpush1.msra.mxu0 0.0
    %1600 = vmatprep.subr.mxu0 0.0
    %1601 = vmatpush1.msra.mxu0 0.0
    %1602 = vmatprep.subr.mxu0 0.0
    %1603 = vmatpush1.msra.mxu0 0.0
    %1604 = vmatprep.subr.mxu0 0.0
    %1605 = vmatpush1.msra.mxu0 0.0
    %1606 = vmatprep.subr.mxu0 0.0
    %1607 = vmatpush1.msra.mxu0 0.0
    %1608 = vmatprep.subr.mxu0 0.0
    %1609 = vmatpush1.msra.mxu0 0.0
    %1610 = vmatprep.subr.mxu0 0.0
    %1611 = vmatpush1.msra.mxu0 0.0
    %1612 = vmatprep.mubr.f32.mxu0 0.0
    %1613 = vmatmul.mubr.f32.gmra.mrb[0].mxu0 %v1546
    %v1614 = vpop.f32.mrb[0].mxu0
    %v1615 = vadd.f32 0.0, %v1614
    %v1616 = vpop.f32.mrb[0].mxu0
    %1617 = vdwg.mxu0
    %1619 = vrot.lane.b32.xlu0 %v1542, 32
    %v1620 = vpop.permute.xlu0 %1619
    %v1621 = vsel %vm89, %v1620, 0
    %1623 = vmatprep.subr.mxu0 0.0
    %1624 = vmatpush1.msra.mxu0 %v73
    %1625 = vmatprep.subr.mxu0 0.0
    %1626 = vmatpush1.msra.mxu0 %v74
    %1627 = vmatprep.subr.mxu0 0.0
    %1628 = vmatpush1.msra.mxu0 %v75
    %1629 = vmatprep.subr.mxu0 0.0
    %1630 = vmatpush1.msra.mxu0 %v76
    %1631 = vmatprep.subr.mxu0 0.0
    %1632 = vmatpush1.msra.mxu0 0.0
    %1633 = vmatprep.subr.mxu0 0.0
    %1634 = vmatpush1.msra.mxu0 0.0
    %1635 = vmatprep.subr.mxu0 0.0
    %1636 = vmatpush1.msra.mxu0 0.0
    %1637 = vmatprep.subr.mxu0 0.0
    %1638 = vmatpush1.msra.mxu0 0.0
    %1639 = vmatprep.subr.mxu0 0.0
    %1640 = vmatpush1.msra.mxu0 0.0
    %1641 = vmatprep.subr.mxu0 0.0
    %1642 = vmatpush1.msra.mxu0 0.0
    %1643 = vmatprep.subr.mxu0 0.0
    %1644 = vmatpush1.msra.mxu0 0.0
    %1645 = vmatprep.subr.mxu0 0.0
    %1646 = vmatpush1.msra.mxu0 0.0
    %1647 = vmatprep.subr.mxu0 0.0
    %1648 = vmatpush1.msra.mxu0 0.0
    %1649 = vmatprep.subr.mxu0 0.0
    %1650 = vmatpush1.msra.mxu0 0.0
    %1651 = vmatprep.subr.mxu0 0.0
    %1652 = vmatpush1.msra.mxu0 0.0
    %1653 = vmatprep.subr.mxu0 0.0
    %1654 = vmatpush1.msra.mxu0 0.0
    %1655 = vmatprep.subr.mxu0 0.0
    %1656 = vmatpush1.msra.mxu0 0.0
    %1657 = vmatprep.subr.mxu0 0.0
    %1658 = vmatpush1.msra.mxu0 0.0
    %1659 = vmatprep.subr.mxu0 0.0
    %1660 = vmatpush1.msra.mxu0 0.0
    %1661 = vmatprep.subr.mxu0 0.0
    %1662 = vmatpush1.msra.mxu0 0.0
    %1663 = vmatprep.subr.mxu0 0.0
    %1664 = vmatpush1.msra.mxu0 0.0
    %1665 = vmatprep.subr.mxu0 0.0
    %1666 = vmatpush1.msra.mxu0 0.0
    %1667 = vmatprep.subr.mxu0 0.0
    %1668 = vmatpush1.msra.mxu0 0.0
    %1669 = vmatprep.subr.mxu0 0.0
    %1670 = vmatpush1.msra.mxu0 0.0
    %1671 = vmatprep.subr.mxu0 0.0
    %1672 = vmatpush1.msra.mxu0 0.0
    %1673 = vmatprep.subr.mxu0 0.0
    %1674 = vmatpush1.msra.mxu0 0.0
    %1675 = vmatprep.subr.mxu0 0.0
    %1676 = vmatpush1.msra.mxu0 0.0
    %1677 = vmatprep.subr.mxu0 0.0
    %1678 = vmatpush1.msra.mxu0 0.0
    %1679 = vmatprep.subr.mxu0 0.0
    %1680 = vmatpush1.msra.mxu0 0.0
    %1681 = vmatprep.subr.mxu0 0.0
    %1682 = vmatpush1.msra.mxu0 0.0
    %1683 = vmatprep.subr.mxu0 0.0
    %1684 = vmatpush1.msra.mxu0 0.0
    %1685 = vmatprep.subr.mxu0 0.0
    %1686 = vmatpush1.msra.mxu0 0.0
    %1687 = vmatprep.mubr.f32.mxu0 0.0
    %1688 = vmatmul.mubr.f32.gmra.mrb[0].mxu0 %v1621
    %v1689 = vpop.f32.mrb[0].mxu0
    %v1690 = vadd.f32 %v1615, %v1689
    %v1691 = vpop.f32.mrb[0].mxu0
    %1692 = vdwg.mxu0
    %v1693 = vadd.f32 %v1690, %v86
    %v1694 = vxor.u32 %v1693, 2147483648
    %v1695 = vmul.f32 %v1694, 1.442695
    %v1696 = vpow.pop %v1695
    %v1697 = vadd.f32 %v1696, 1.0
    %v1698 = vrcp.pop %v1697
    %v1699 = vmul.f32 1.0, %v1698
    %v1700 = vtanh.pop %v1693
    %v1701 = vmul.f32 %v1699, %v1439
    %1703 = vrot.lane.b32.xlu0 %v1700, 64
    %v1704 = vpop.permute.xlu0 %1703
    %v1706 = vmul.f32 %v1699, %v1704
    %1708 = vrot.lane.b32.xlu0 %v1706, 32
    %v1709 = vpop.permute.xlu0 %1708
    %v1711 = vadd.f32 %v1701, %v1709
    %v1712 = vtanh.pop %v1711
    %1714 = vrot.lane.b32.xlu0 %v1712, 64
    %v1715 = vpop.permute.xlu0 %1714
    %v1717 = vmul.f32 %v1699, %v1715
    %s1718 = scalar_lea.vmem [#allocation3], 12
    %v1719 = vld [vmem:[%s1718] sm:$0x3]
    %1720 = vmatprep.subr.mxu0 0.0
    %1721 = vmatpush1.msra.mxu0 %v69
    %1722 = vmatprep.subr.mxu0 0.0
    %1723 = vmatpush1.msra.mxu0 %v70
    %1724 = vmatprep.subr.mxu0 0.0
    %1725 = vmatpush1.msra.mxu0 %v71
    %1726 = vmatprep.subr.mxu0 0.0
    %1727 = vmatpush1.msra.mxu0 %v72
    %1728 = vmatprep.subr.mxu0 0.0
    %1729 = vmatpush1.msra.mxu0 0.0
    %1730 = vmatprep.subr.mxu0 0.0
    %1731 = vmatpush1.msra.mxu0 0.0
    %1732 = vmatprep.subr.mxu0 0.0
    %1733 = vmatpush1.msra.mxu0 0.0
    %1734 = vmatprep.subr.mxu0 0.0
    %1735 = vmatpush1.msra.mxu0 0.0
    %1736 = vmatprep.subr.mxu0 0.0
    %1737 = vmatpush1.msra.mxu0 0.0
    %1738 = vmatprep.subr.mxu0 0.0
    %1739 = vmatpush1.msra.mxu0 0.0
    %1740 = vmatprep.subr.mxu0 0.0
    %1741 = vmatpush1.msra.mxu0 0.0
    %1742 = vmatprep.subr.mxu0 0.0
    %1743 = vmatpush1.msra.mxu0 0.0
    %1744 = vmatprep.subr.mxu0 0.0
    %1745 = vmatpush1.msra.mxu0 0.0
    %1746 = vmatprep.subr.mxu0 0.0
    %1747 = vmatpush1.msra.mxu0 0.0
    %1748 = vmatprep.subr.mxu0 0.0
    %1749 = vmatpush1.msra.mxu0 0.0
    %1750 = vmatprep.subr.mxu0 0.0
    %1751 = vmatpush1.msra.mxu0 0.0
    %1752 = vmatprep.subr.mxu0 0.0
    %1753 = vmatpush1.msra.mxu0 0.0
    %1754 = vmatprep.subr.mxu0 0.0
    %1755 = vmatpush1.msra.mxu0 0.0
    %1756 = vmatprep.subr.mxu0 0.0
    %1757 = vmatpush1.msra.mxu0 0.0
    %1758 = vmatprep.subr.mxu0 0.0
    %1759 = vmatpush1.msra.mxu0 0.0
    %1760 = vmatprep.subr.mxu0 0.0
    %1761 = vmatpush1.msra.mxu0 0.0
    %1762 = vmatprep.subr.mxu0 0.0
    %1763 = vmatpush1.msra.mxu0 0.0
    %1764 = vmatprep.subr.mxu0 0.0
    %1765 = vmatpush1.msra.mxu0 0.0
    %1766 = vmatprep.subr.mxu0 0.0
    %1767 = vmatpush1.msra.mxu0 0.0
    %1768 = vmatprep.subr.mxu0 0.0
    %1769 = vmatpush1.msra.mxu0 0.0
    %1770 = vmatprep.subr.mxu0 0.0
    %1771 = vmatpush1.msra.mxu0 0.0
    %1772 = vmatprep.subr.mxu0 0.0
    %1773 = vmatpush1.msra.mxu0 0.0
    %1774 = vmatprep.subr.mxu0 0.0
    %1775 = vmatpush1.msra.mxu0 0.0
    %1776 = vmatprep.subr.mxu0 0.0
    %1777 = vmatpush1.msra.mxu0 0.0
    %1778 = vmatprep.subr.mxu0 0.0
    %1779 = vmatpush1.msra.mxu0 0.0
    %1780 = vmatprep.subr.mxu0 0.0
    %1781 = vmatpush1.msra.mxu0 0.0
    %1782 = vmatprep.subr.mxu0 0.0
    %1783 = vmatpush1.msra.mxu0 0.0
    %1784 = vmatprep.mubr.f32.mxu0 0.0
    %1785 = vmatmul.mubr.f32.gmra.mrb[0].mxu0 %v1621
    %v1786 = vpop.f32.mrb[0].mxu0
    %v1787 = vadd.f32 0.0, %v1786
    %v1788 = vpop.f32.mrb[0].mxu0
    %1789 = vdwg.mxu0
    %v1790 = vadd.f32 %v1719, %v1787
    %v1791 = vxor.u32 %v1790, 2147483648
    %v1792 = vmul.f32 %v1791, 1.442695
    %v1793 = vpow.pop %v1792
    %v1794 = vadd.f32 %v1793, 1.0
    %v1795 = vrcp.pop %v1794
    %v1796 = vmul.f32 1.0, %v1795
    %v1797 = vtanh.pop %v1790
    %v1798 = vmul.f32 %v1796, %v1536
    %1800 = vrot.lane.b32.xlu0 %v1797, 64
    %v1801 = vpop.permute.xlu0 %1800
    %v1803 = vmul.f32 %v1796, %v1801
    %1805 = vrot.lane.b32.xlu0 %v1803, 32
    %v1806 = vpop.permute.xlu0 %1805
    %v1808 = vadd.f32 %v1798, %v1806
    %v1809 = vtanh.pop %v1808
    %1811 = vrot.lane.b32.xlu0 %v1809, 64
    %v1812 = vpop.permute.xlu0 %1811
    %v1814 = vmul.f32 %v1796, %v1812
    %1816 = vrot.lane.b32.xlu0 %v1717, 32
    %v1817 = vpop.permute.xlu0 %1816
    %v1818 = vsel %vm89, %v1817, 0
    %1820 = vmatprep.subr.mxu0 0.0
    %1821 = vmatpush1.msra.mxu0 %v77
    %1822 = vmatprep.subr.mxu0 0.0
    %1823 = vmatpush1.msra.mxu0 %v78
    %1824 = vmatprep.subr.mxu0 0.0
    %1825 = vmatpush1.msra.mxu0 %v79
    %1826 = vmatprep.subr.mxu0 0.0
    %1827 = vmatpush1.msra.mxu0 %v80
    %1828 = vmatprep.subr.mxu0 0.0
    %1829 = vmatpush1.msra.mxu0 0.0
    %1830 = vmatprep.subr.mxu0 0.0
    %1831 = vmatpush1.msra.mxu0 0.0
    %1832 = vmatprep.subr.mxu0 0.0
    %1833 = vmatpush1.msra.mxu0 0.0
    %1834 = vmatprep.subr.mxu0 0.0
    %1835 = vmatpush1.msra.mxu0 0.0
    %1836 = vmatprep.subr.mxu0 0.0
    %1837 = vmatpush1.msra.mxu0 0.0
    %1838 = vmatprep.subr.mxu0 0.0
    %1839 = vmatpush1.msra.mxu0 0.0
    %1840 = vmatprep.subr.mxu0 0.0
    %1841 = vmatpush1.msra.mxu0 0.0
    %1842 = vmatprep.subr.mxu0 0.0
    %1843 = vmatpush1.msra.mxu0 0.0
    %1844 = vmatprep.subr.mxu0 0.0
    %1845 = vmatpush1.msra.mxu0 0.0
    %1846 = vmatprep.subr.mxu0 0.0
    %1847 = vmatpush1.msra.mxu0 0.0
    %1848 = vmatprep.subr.mxu0 0.0
    %1849 = vmatpush1.msra.mxu0 0.0
    %1850 = vmatprep.subr.mxu0 0.0
    %1851 = vmatpush1.msra.mxu0 0.0
    %1852 = vmatprep.subr.mxu0 0.0
    %1853 = vmatpush1.msra.mxu0 0.0
    %1854 = vmatprep.subr.mxu0 0.0
    %1855 = vmatpush1.msra.mxu0 0.0
    %1856 = vmatprep.subr.mxu0 0.0
    %1857 = vmatpush1.msra.mxu0 0.0
    %1858 = vmatprep.subr.mxu0 0.0
    %1859 = vmatpush1.msra.mxu0 0.0
    %1860 = vmatprep.subr.mxu0 0.0
    %1861 = vmatpush1.msra.mxu0 0.0
    %1862 = vmatprep.subr.mxu0 0.0
    %1863 = vmatpush1.msra.mxu0 0.0
    %1864 = vmatprep.subr.mxu0 0.0
    %1865 = vmatpush1.msra.mxu0 0.0
    %1866 = vmatprep.subr.mxu0 0.0
    %1867 = vmatpush1.msra.mxu0 0.0
    %1868 = vmatprep.subr.mxu0 0.0
    %1869 = vmatpush1.msra.mxu0 0.0
    %1870 = vmatprep.subr.mxu0 0.0
    %1871 = vmatpush1.msra.mxu0 0.0
    %1872 = vmatprep.subr.mxu0 0.0
    %1873 = vmatpush1.msra.mxu0 0.0
    %1874 = vmatprep.subr.mxu0 0.0
    %1875 = vmatpush1.msra.mxu0 0.0
    %1876 = vmatprep.subr.mxu0 0.0
    %1877 = vmatpush1.msra.mxu0 0.0
    %1878 = vmatprep.subr.mxu0 0.0
    %1879 = vmatpush1.msra.mxu0 0.0
    %1880 = vmatprep.subr.mxu0 0.0
    %1881 = vmatpush1.msra.mxu0 0.0
    %1882 = vmatprep.subr.mxu0 0.0
    %1883 = vmatpush1.msra.mxu0 0.0
    %1884 = vmatprep.mubr.f32.mxu0 0.0
    %1885 = vmatmul.mubr.f32.gmra.mrb[0].mxu0 %v1818
    %v1886 = vpop.f32.mrb[0].mxu0
    %v1887 = vadd.f32 0.0, %v1886
    %v1888 = vpop.f32.mrb[0].mxu0
    %1889 = vdwg.mxu0
    %1891 = vrot.lane.b32.xlu0 %v1814, 32
    %v1892 = vpop.permute.xlu0 %1891
    %v1893 = vsel %vm89, %v1892, 0
    %1895 = vmatprep.subr.mxu0 0.0
    %1896 = vmatpush1.msra.mxu0 %v73
    %1897 = vmatprep.subr.mxu0 0.0
    %1898 = vmatpush1.msra.mxu0 %v74
    %1899 = vmatprep.subr.mxu0 0.0
    %1900 = vmatpush1.msra.mxu0 %v75
    %1901 = vmatprep.subr.mxu0 0.0
    %1902 = vmatpush1.msra.mxu0 %v76
    %1903 = vmatprep.subr.mxu0 0.0
    %1904 = vmatpush1.msra.mxu0 0.0
    %1905 = vmatprep.subr.mxu0 0.0
    %1906 = vmatpush1.msra.mxu0 0.0
    %1907 = vmatprep.subr.mxu0 0.0
    %1908 = vmatpush1.msra.mxu0 0.0
    %1909 = vmatprep.subr.mxu0 0.0
    %1910 = vmatpush1.msra.mxu0 0.0
    %1911 = vmatprep.subr.mxu0 0.0
    %1912 = vmatpush1.msra.mxu0 0.0
    %1913 = vmatprep.subr.mxu0 0.0
    %1914 = vmatpush1.msra.mxu0 0.0
    %1915 = vmatprep.subr.mxu0 0.0
    %1916 = vmatpush1.msra.mxu0 0.0
    %1917 = vmatprep.subr.mxu0 0.0
    %1918 = vmatpush1.msra.mxu0 0.0
    %1919 = vmatprep.subr.mxu0 0.0
    %1920 = vmatpush1.msra.mxu0 0.0
    %1921 = vmatprep.subr.mxu0 0.0
    %1922 = vmatpush1.msra.mxu0 0.0
    %1923 = vmatprep.subr.mxu0 0.0
    %1924 = vmatpush1.msra.mxu0 0.0
    %1925 = vmatprep.subr.mxu0 0.0
    %1926 = vmatpush1.msra.mxu0 0.0
    %1927 = vmatprep.subr.mxu0 0.0
    %1928 = vmatpush1.msra.mxu0 0.0
    %1929 = vmatprep.subr.mxu0 0.0
    %1930 = vmatpush1.msra.mxu0 0.0
    %1931 = vmatprep.subr.mxu0 0.0
    %1932 = vmatpush1.msra.mxu0 0.0
    %1933 = vmatprep.subr.mxu0 0.0
    %1934 = vmatpush1.msra.mxu0 0.0
    %1935 = vmatprep.subr.mxu0 0.0
    %1936 = vmatpush1.msra.mxu0 0.0
    %1937 = vmatprep.subr.mxu0 0.0
    %1938 = vmatpush1.msra.mxu0 0.0
    %1939 = vmatprep.subr.mxu0 0.0
    %1940 = vmatpush1.msra.mxu0 0.0
    %1941 = vmatprep.subr.mxu0 0.0
    %1942 = vmatpush1.msra.mxu0 0.0
    %1943 = vmatprep.subr.mxu0 0.0
    %1944 = vmatpush1.msra.mxu0 0.0
    %1945 = vmatprep.subr.mxu0 0.0
    %1946 = vmatpush1.msra.mxu0 0.0
    %1947 = vmatprep.subr.mxu0 0.0
    %1948 = vmatpush1.msra.mxu0 0.0
    %1949 = vmatprep.subr.mxu0 0.0
    %1950 = vmatpush1.msra.mxu0 0.0
    %1951 = vmatprep.subr.mxu0 0.0
    %1952 = vmatpush1.msra.mxu0 0.0
    %1953 = vmatprep.subr.mxu0 0.0
    %1954 = vmatpush1.msra.mxu0 0.0
    %1955 = vmatprep.subr.mxu0 0.0
    %1956 = vmatpush1.msra.mxu0 0.0
    %1957 = vmatprep.subr.mxu0 0.0
    %1958 = vmatpush1.msra.mxu0 0.0
    %1959 = vmatprep.mubr.f32.mxu0 0.0
    %1960 = vmatmul.mubr.f32.gmra.mrb[0].mxu0 %v1893
    %v1961 = vpop.f32.mrb[0].mxu0
    %v1962 = vadd.f32 %v1887, %v1961
    %v1963 = vpop.f32.mrb[0].mxu0
    %1964 = vdwg.mxu0
    %v1965 = vadd.f32 %v1962, %v86
    %v1966 = vxor.u32 %v1965, 2147483648
    %v1967 = vmul.f32 %v1966, 1.442695
    %v1968 = vpow.pop %v1967
    %v1969 = vadd.f32 %v1968, 1.0
    %v1970 = vrcp.pop %v1969
    %v1971 = vmul.f32 1.0, %v1970
    %v1972 = vtanh.pop %v1965
    %v1973 = vmul.f32 %v1971, %v1711
    %1975 = vrot.lane.b32.xlu0 %v1972, 64
    %v1976 = vpop.permute.xlu0 %1975
    %v1978 = vmul.f32 %v1971, %v1976
    %1980 = vrot.lane.b32.xlu0 %v1978, 32
    %v1981 = vpop.permute.xlu0 %1980
    %v1983 = vadd.f32 %v1973, %v1981
    %v1984 = vtanh.pop %v1983
    %1986 = vrot.lane.b32.xlu0 %v1984, 64
    %v1987 = vpop.permute.xlu0 %1986
    %v1989 = vmul.f32 %v1971, %v1987
    %s1990 = scalar_lea.vmem [#allocation3], 14
    %v1991 = vld [vmem:[%s1990] sm:$0x3]
    %1992 = vmatprep.subr.mxu0 0.0
    %1993 = vmatpush1.msra.mxu0 %v69
    %1994 = vmatprep.subr.mxu0 0.0
    %1995 = vmatpush1.msra.mxu0 %v70
    %1996 = vmatprep.subr.mxu0 0.0
    %1997 = vmatpush1.msra.mxu0 %v71
    %1998 = vmatprep.subr.mxu0 0.0
    %1999 = vmatpush1.msra.mxu0 %v72
    %2000 = vmatprep.subr.mxu0 0.0
    %2001 = vmatpush1.msra.mxu0 0.0
    %2002 = vmatprep.subr.mxu0 0.0
    %2003 = vmatpush1.msra.mxu0 0.0
    %2004 = vmatprep.subr.mxu0 0.0
    %2005 = vmatpush1.msra.mxu0 0.0
    %2006 = vmatprep.subr.mxu0 0.0
    %2007 = vmatpush1.msra.mxu0 0.0
    %2008 = vmatprep.subr.mxu0 0.0
    %2009 = vmatpush1.msra.mxu0 0.0
    %2010 = vmatprep.subr.mxu0 0.0
    %2011 = vmatpush1.msra.mxu0 0.0
    %2012 = vmatprep.subr.mxu0 0.0
    %2013 = vmatpush1.msra.mxu0 0.0
    %2014 = vmatprep.subr.mxu0 0.0
    %2015 = vmatpush1.msra.mxu0 0.0
    %2016 = vmatprep.subr.mxu0 0.0
    %2017 = vmatpush1.msra.mxu0 0.0
    %2018 = vmatprep.subr.mxu0 0.0
    %2019 = vmatpush1.msra.mxu0 0.0
    %2020 = vmatprep.subr.mxu0 0.0
    %2021 = vmatpush1.msra.mxu0 0.0
    %2022 = vmatprep.subr.mxu0 0.0
    %2023 = vmatpush1.msra.mxu0 0.0
    %2024 = vmatprep.subr.mxu0 0.0
    %2025 = vmatpush1.msra.mxu0 0.0
    %2026 = vmatprep.subr.mxu0 0.0
    %2027 = vmatpush1.msra.mxu0 0.0
    %2028 = vmatprep.subr.mxu0 0.0
    %2029 = vmatpush1.msra.mxu0 0.0
    %2030 = vmatprep.subr.mxu0 0.0
    %2031 = vmatpush1.msra.mxu0 0.0
    %2032 = vmatprep.subr.mxu0 0.0
    %2033 = vmatpush1.msra.mxu0 0.0
    %2034 = vmatprep.subr.mxu0 0.0
    %2035 = vmatpush1.msra.mxu0 0.0
    %2036 = vmatprep.subr.mxu0 0.0
    %2037 = vmatpush1.msra.mxu0 0.0
    %2038 = vmatprep.subr.mxu0 0.0
    %2039 = vmatpush1.msra.mxu0 0.0
    %2040 = vmatprep.subr.mxu0 0.0
    %2041 = vmatpush1.msra.mxu0 0.0
    %2042 = vmatprep.subr.mxu0 0.0
    %2043 = vmatpush1.msra.mxu0 0.0
    %2044 = vmatprep.subr.mxu0 0.0
    %2045 = vmatpush1.msra.mxu0 0.0
    %2046 = vmatprep.subr.mxu0 0.0
    %2047 = vmatpush1.msra.mxu0 0.0
    %2048 = vmatprep.subr.mxu0 0.0
    %2049 = vmatpush1.msra.mxu0 0.0
    %2050 = vmatprep.subr.mxu0 0.0
    %2051 = vmatpush1.msra.mxu0 0.0
    %2052 = vmatprep.subr.mxu0 0.0
    %2053 = vmatpush1.msra.mxu0 0.0
    %2054 = vmatprep.subr.mxu0 0.0
    %2055 = vmatpush1.msra.mxu0 0.0
    %2056 = vmatprep.mubr.f32.mxu0 0.0
    %2057 = vmatmul.mubr.f32.gmra.mrb[0].mxu0 %v1893
    %v2058 = vpop.f32.mrb[0].mxu0
    %v2059 = vadd.f32 0.0, %v2058
    %v2060 = vpop.f32.mrb[0].mxu0
    %2061 = vdwg.mxu0
    %v2062 = vadd.f32 %v1991, %v2059
    %v2063 = vxor.u32 %v2062, 2147483648
    %v2064 = vmul.f32 %v2063, 1.442695
    %v2065 = vpow.pop %v2064
    %v2066 = vadd.f32 %v2065, 1.0
    %v2067 = vrcp.pop %v2066
    %v2068 = vmul.f32 1.0, %v2067
    %v2069 = vtanh.pop %v2062
    %v2070 = vmul.f32 %v2068, %v1808
    %2072 = vrot.lane.b32.xlu0 %v2069, 64
    %v2073 = vpop.permute.xlu0 %2072
    %v2075 = vmul.f32 %v2068, %v2073
    %2077 = vrot.lane.b32.xlu0 %v2075, 32
    %v2078 = vpop.permute.xlu0 %2077
    %v2080 = vadd.f32 %v2070, %v2078
    %v2081 = vtanh.pop %v2080
    %2083 = vrot.lane.b32.xlu0 %v2081, 64
    %v2084 = vpop.permute.xlu0 %2083
    %v2086 = vmul.f32 %v2068, %v2084
    %2088 = vrot.lane.b32.xlu0 %v1989, 32
    %v2089 = vpop.permute.xlu0 %2088
    %v2090 = vsel %vm89, %v2089, 0
    %2092 = vmatprep.subr.mxu0 0.0
    %2093 = vmatpush1.msra.mxu0 %v77
    %2094 = vmatprep.subr.mxu0 0.0
    %2095 = vmatpush1.msra.mxu0 %v78
    %2096 = vmatprep.subr.mxu0 0.0
    %2097 = vmatpush1.msra.mxu0 %v79
    %2098 = vmatprep.subr.mxu0 0.0
    %2099 = vmatpush1.msra.mxu0 %v80
    %2100 = vmatprep.subr.mxu0 0.0
    %2101 = vmatpush1.msra.mxu0 0.0
    %2102 = vmatprep.subr.mxu0 0.0
    %2103 = vmatpush1.msra.mxu0 0.0
    %2104 = vmatprep.subr.mxu0 0.0
    %2105 = vmatpush1.msra.mxu0 0.0
    %2106 = vmatprep.subr.mxu0 0.0
    %2107 = vmatpush1.msra.mxu0 0.0
    %2108 = vmatprep.subr.mxu0 0.0
    %2109 = vmatpush1.msra.mxu0 0.0
    %2110 = vmatprep.subr.mxu0 0.0
    %2111 = vmatpush1.msra.mxu0 0.0
    %2112 = vmatprep.subr.mxu0 0.0
    %2113 = vmatpush1.msra.mxu0 0.0
    %2114 = vmatprep.subr.mxu0 0.0
    %2115 = vmatpush1.msra.mxu0 0.0
    %2116 = vmatprep.subr.mxu0 0.0
    %2117 = vmatpush1.msra.mxu0 0.0
    %2118 = vmatprep.subr.mxu0 0.0
    %2119 = vmatpush1.msra.mxu0 0.0
    %2120 = vmatprep.subr.mxu0 0.0
    %2121 = vmatpush1.msra.mxu0 0.0
    %2122 = vmatprep.subr.mxu0 0.0
    %2123 = vmatpush1.msra.mxu0 0.0
    %2124 = vmatprep.subr.mxu0 0.0
    %2125 = vmatpush1.msra.mxu0 0.0
    %2126 = vmatprep.subr.mxu0 0.0
    %2127 = vmatpush1.msra.mxu0 0.0
    %2128 = vmatprep.subr.mxu0 0.0
    %2129 = vmatpush1.msra.mxu0 0.0
    %2130 = vmatprep.subr.mxu0 0.0
    %2131 = vmatpush1.msra.mxu0 0.0
    %2132 = vmatprep.subr.mxu0 0.0
    %2133 = vmatpush1.msra.mxu0 0.0
    %2134 = vmatprep.subr.mxu0 0.0
    %2135 = vmatpush1.msra.mxu0 0.0
    %2136 = vmatprep.subr.mxu0 0.0
    %2137 = vmatpush1.msra.mxu0 0.0
    %2138 = vmatprep.subr.mxu0 0.0
    %2139 = vmatpush1.msra.mxu0 0.0
    %2140 = vmatprep.subr.mxu0 0.0
    %2141 = vmatpush1.msra.mxu0 0.0
    %2142 = vmatprep.subr.mxu0 0.0
    %2143 = vmatpush1.msra.mxu0 0.0
    %2144 = vmatprep.subr.mxu0 0.0
    %2145 = vmatpush1.msra.mxu0 0.0
    %2146 = vmatprep.subr.mxu0 0.0
    %2147 = vmatpush1.msra.mxu0 0.0
    %2148 = vmatprep.subr.mxu0 0.0
    %2149 = vmatpush1.msra.mxu0 0.0
    %2150 = vmatprep.subr.mxu0 0.0
    %2151 = vmatpush1.msra.mxu0 0.0
    %2152 = vmatprep.subr.mxu0 0.0
    %2153 = vmatpush1.msra.mxu0 0.0
    %2154 = vmatprep.subr.mxu0 0.0
    %2155 = vmatpush1.msra.mxu0 0.0
    %2156 = vmatprep.mubr.f32.mxu0 0.0
    %2157 = vmatmul.mubr.f32.gmra.mrb[0].mxu0 %v2090
    %v2158 = vpop.f32.mrb[0].mxu0
    %v2159 = vadd.f32 0.0, %v2158
    %v2160 = vpop.f32.mrb[0].mxu0
    %2161 = vdwg.mxu0
    %2163 = vrot.lane.b32.xlu0 %v2086, 32
    %v2164 = vpop.permute.xlu0 %2163
    %v2165 = vsel %vm89, %v2164, 0
    %2167 = vmatprep.subr.mxu0 0.0
    %2168 = vmatpush1.msra.mxu0 %v73
    %2169 = vmatprep.subr.mxu0 0.0
    %2170 = vmatpush1.msra.mxu0 %v74
    %2171 = vmatprep.subr.mxu0 0.0
    %2172 = vmatpush1.msra.mxu0 %v75
    %2173 = vmatprep.subr.mxu0 0.0
    %2174 = vmatpush1.msra.mxu0 %v76
    %2175 = vmatprep.subr.mxu0 0.0
    %2176 = vmatpush1.msra.mxu0 0.0
    %2177 = vmatprep.subr.mxu0 0.0
    %2178 = vmatpush1.msra.mxu0 0.0
    %2179 = vmatprep.subr.mxu0 0.0
    %2180 = vmatpush1.msra.mxu0 0.0
    %2181 = vmatprep.subr.mxu0 0.0
    %2182 = vmatpush1.msra.mxu0 0.0
    %2183 = vmatprep.subr.mxu0 0.0
    %2184 = vmatpush1.msra.mxu0 0.0
    %2185 = vmatprep.subr.mxu0 0.0
    %2186 = vmatpush1.msra.mxu0 0.0
    %2187 = vmatprep.subr.mxu0 0.0
    %2188 = vmatpush1.msra.mxu0 0.0
    %2189 = vmatprep.subr.mxu0 0.0
    %2190 = vmatpush1.msra.mxu0 0.0
    %2191 = vmatprep.subr.mxu0 0.0
    %2192 = vmatpush1.msra.mxu0 0.0
    %2193 = vmatprep.subr.mxu0 0.0
    %2194 = vmatpush1.msra.mxu0 0.0
    %2195 = vmatprep.subr.mxu0 0.0
    %2196 = vmatpush1.msra.mxu0 0.0
    %2197 = vmatprep.subr.mxu0 0.0
    %2198 = vmatpush1.msra.mxu0 0.0
    %2199 = vmatprep.subr.mxu0 0.0
    %2200 = vmatpush1.msra.mxu0 0.0
    %2201 = vmatprep.subr.mxu0 0.0
    %2202 = vmatpush1.msra.mxu0 0.0
    %2203 = vmatprep.subr.mxu0 0.0
    %2204 = vmatpush1.msra.mxu0 0.0
    %2205 = vmatprep.subr.mxu0 0.0
    %2206 = vmatpush1.msra.mxu0 0.0
    %2207 = vmatprep.subr.mxu0 0.0
    %2208 = vmatpush1.msra.mxu0 0.0
    %2209 = vmatprep.subr.mxu0 0.0
    %2210 = vmatpush1.msra.mxu0 0.0
    %2211 = vmatprep.subr.mxu0 0.0
    %2212 = vmatpush1.msra.mxu0 0.0
    %2213 = vmatprep.subr.mxu0 0.0
    %2214 = vmatpush1.msra.mxu0 0.0
    %2215 = vmatprep.subr.mxu0 0.0
    %2216 = vmatpush1.msra.mxu0 0.0
    %2217 = vmatprep.subr.mxu0 0.0
    %2218 = vmatpush1.msra.mxu0 0.0
    %2219 = vmatprep.subr.mxu0 0.0
    %2220 = vmatpush1.msra.mxu0 0.0
    %2221 = vmatprep.subr.mxu0 0.0
    %2222 = vmatpush1.msra.mxu0 0.0
    %2223 = vmatprep.subr.mxu0 0.0
    %2224 = vmatpush1.msra.mxu0 0.0
    %2225 = vmatprep.subr.mxu0 0.0
    %2226 = vmatpush1.msra.mxu0 0.0
    %2227 = vmatprep.subr.mxu0 0.0
    %2228 = vmatpush1.msra.mxu0 0.0
    %2229 = vmatprep.subr.mxu0 0.0
    %2230 = vmatpush1.msra.mxu0 0.0
    %2231 = vmatprep.mubr.f32.mxu0 0.0
    %2232 = vmatmul.mubr.f32.gmra.mrb[0].mxu0 %v2165
    %v2233 = vpop.f32.mrb[0].mxu0
    %v2234 = vadd.f32 %v2159, %v2233
    %v2235 = vpop.f32.mrb[0].mxu0
    %2236 = vdwg.mxu0
    %v2237 = vadd.f32 %v2234, %v86
    %v2238 = vxor.u32 %v2237, 2147483648
    %v2239 = vmul.f32 %v2238, 1.442695
    %v2240 = vpow.pop %v2239
    %v2241 = vadd.f32 %v2240, 1.0
    %v2242 = vrcp.pop %v2241
    %v2243 = vmul.f32 1.0, %v2242
    %v2244 = vtanh.pop %v2237
    %v2245 = vmul.f32 %v2243, %v1983
    %2247 = vrot.lane.b32.xlu0 %v2244, 64
    %v2248 = vpop.permute.xlu0 %2247
    %v2250 = vmul.f32 %v2243, %v2248
    %2252 = vrot.lane.b32.xlu0 %v2250, 32
    %v2253 = vpop.permute.xlu0 %2252
    %v2255 = vadd.f32 %v2245, %v2253
    %v2256 = vtanh.pop %v2255
    %2258 = vrot.lane.b32.xlu0 %v2256, 64
    %v2259 = vpop.permute.xlu0 %2258
    %v2261 = vmul.f32 %v2243, %v2259
    %v2262 = vld [vmem:[%s5] sm:$0xff]
    %v2263 = vld [vmem:[%s5 + $0x8] sm:$0xff]
    %v2264 = vld [vmem:[%s5 + $0x10] sm:$0xff]
    %v2265 = vld [vmem:[%s5 + $0x18] sm:$0xff]
    %v2266 = vld [vmem:[#allocation2] sm:$0x1]
    %v2268 = vlaneseq
    %v2269 = vshrl.u32 %v2268, 7
    %v2270 = vsub.s32 0, %v2269
    %v2271 = vrot.slane %v2266, %v2270
    %2274 = vrot.lane.b32.xlu0 %v2261, 32
    %v2275 = vpop.permute.xlu0 %2274
    %v2276 = vsel %vm89, %v2275, 0
    %2278 = vmatprep.subr.mxu0 0.0
    %2279 = vmatpush1.msra.mxu0 %v2262
    %2280 = vmatprep.subr.mxu0 0.0
    %2281 = vmatpush1.msra.mxu0 %v2263
    %2282 = vmatprep.subr.mxu0 0.0
    %2283 = vmatpush1.msra.mxu0 %v2264
    %2284 = vmatprep.subr.mxu0 0.0
    %2285 = vmatpush1.msra.mxu0 %v2265
    %2286 = vmatprep.subr.mxu0 0.0
    %2287 = vmatpush1.msra.mxu0 0.0
    %2288 = vmatprep.subr.mxu0 0.0
    %2289 = vmatpush1.msra.mxu0 0.0
    %2290 = vmatprep.subr.mxu0 0.0
    %2291 = vmatpush1.msra.mxu0 0.0
    %2292 = vmatprep.subr.mxu0 0.0
    %2293 = vmatpush1.msra.mxu0 0.0
    %2294 = vmatprep.subr.mxu0 0.0
    %2295 = vmatpush1.msra.mxu0 0.0
    %2296 = vmatprep.subr.mxu0 0.0
    %2297 = vmatpush1.msra.mxu0 0.0
    %2298 = vmatprep.subr.mxu0 0.0
    %2299 = vmatpush1.msra.mxu0 0.0
    %2300 = vmatprep.subr.mxu0 0.0
    %2301 = vmatpush1.msra.mxu0 0.0
    %2302 = vmatprep.subr.mxu0 0.0
    %2303 = vmatpush1.msra.mxu0 0.0
    %2304 = vmatprep.subr.mxu0 0.0
    %2305 = vmatpush1.msra.mxu0 0.0
    %2306 = vmatprep.subr.mxu0 0.0
    %2307 = vmatpush1.msra.mxu0 0.0
    %2308 = vmatprep.subr.mxu0 0.0
    %2309 = vmatpush1.msra.mxu0 0.0
    %2310 = vmatprep.subr.mxu0 0.0
    %2311 = vmatpush1.msra.mxu0 0.0
    %2312 = vmatprep.subr.mxu0 0.0
    %2313 = vmatpush1.msra.mxu0 0.0
    %2314 = vmatprep.subr.mxu0 0.0
    %2315 = vmatpush1.msra.mxu0 0.0
    %2316 = vmatprep.subr.mxu0 0.0
    %2317 = vmatpush1.msra.mxu0 0.0
    %2318 = vmatprep.subr.mxu0 0.0
    %2319 = vmatpush1.msra.mxu0 0.0
    %2320 = vmatprep.subr.mxu0 0.0
    %2321 = vmatpush1.msra.mxu0 0.0
    %2322 = vmatprep.subr.mxu0 0.0
    %2323 = vmatpush1.msra.mxu0 0.0
    %2324 = vmatprep.subr.mxu0 0.0
    %2325 = vmatpush1.msra.mxu0 0.0
    %2326 = vmatprep.subr.mxu0 0.0
    %2327 = vmatpush1.msra.mxu0 0.0
    %2328 = vmatprep.subr.mxu0 0.0
    %2329 = vmatpush1.msra.mxu0 0.0
    %2330 = vmatprep.subr.mxu0 0.0
    %2331 = vmatpush1.msra.mxu0 0.0
    %2332 = vmatprep.subr.mxu0 0.0
    %2333 = vmatpush1.msra.mxu0 0.0
    %2334 = vmatprep.subr.mxu0 0.0
    %2335 = vmatpush1.msra.mxu0 0.0
    %2336 = vmatprep.subr.mxu0 0.0
    %2337 = vmatpush1.msra.mxu0 0.0
    %2338 = vmatprep.subr.mxu0 0.0
    %2339 = vmatpush1.msra.mxu0 0.0
    %2340 = vmatprep.subr.mxu0 0.0
    %2341 = vmatpush1.msra.mxu0 0.0
    %2342 = vmatprep.mubr.f32.mxu0 0.0
    %2343 = vmatmul.mubr.f32.gmra.mrb[0].mxu0 %v2276
    %v2344 = vpop.f32.mrb[0].mxu0
    %v2345 = vadd.f32 %v2271, %v2344
    %v2346 = vpop.f32.mrb[0].mxu0
    %2347 = vdwg.mxu0
    %vm2348 = vcmask 1024
    %2349 = vst.msk [vmem:[%s7] sm:$0x3] %vm2348, %v2345
    // Predicated region
    $region42: #{tpu_custom_call.1} parent=1 // pred_check
      _
    $region43: #{tpu_custom_call.1} parent=1 // pred_check_branch
      %2351 = sbr.rel (0) target = $region45
    $region44: #{tpu_custom_call.1} parent=1 // pred_region
      _
    $region45: #{tpu_custom_call.1} parent=1 // pred_fallthru
      _
    // Predicated region
    $region46: #{tpu_custom_call.1} parent=1 // pred_check
      _
    $region47: #{tpu_custom_call.1} parent=1 // pred_check_branch
      %2353 = sbr.rel (0) target = $region49
    $region48: #{tpu_custom_call.1} parent=1 // pred_region
      _
    $region49: #{tpu_custom_call.1} parent=1 // pred_fallthru
      _
    %2354 = vsyncpa [#allocation4], 1
    %2355 = vsyncpa [#allocation6], 1

</llo_original>
